<compile_context>
chip_gen: v7x
topology: tpu7x:2x2x1
jax: 0.10.0
libtpu: 0.0.40
codegen_flags: <defaults>
</compile_context>

<pallas_src>
import functools

import jax
import jax.numpy as jnp
from jax.experimental import pallas as pl
from jax.experimental.pallas import tpu as pltpu


def _resblock_kernel(xslab_ref, w1_ref, b1_ref, w2_ref, b2_ref, out_ref, *,
                     res_scale, H):
    """One (batch, H-tile) per grid step.

    xslab_ref : (1, 1, TH+4, W+2, Cp) input slab: 2-row H halo, 1-col W halo, channel pad
    w*_ref    : (9*Cp, Cp) bf16 conv weights (HWIO reshaped, (dy, dx, cin)-major rows)
    b*_ref    : (1, Cp) f32 conv biases
    out_ref   : (1, TH, W, Cp)
    """
    _, TH, W, Cp = out_ref.shape
    t = pl.program_id(1)
    r0 = t * TH                                     # first output row of this tile

    xslab = xslab_ref[0, 0]                         # (TH+4, W+2, Cp), input dtype (f32)

    # Residual: original input rows r0 .. r0+TH-1 (slab rows 2..TH+1, cols 1..W), f32.
    x_res = xslab[2:TH + 2, 1:W + 1, :].astype(jnp.float32).reshape(TH * W, Cp)

    xslab_m = xslab.astype(jnp.bfloat16)            # bf16 operands for the MXU

    def im2col(src, out_h):
        # src: (out_h+2, W+2, Cp) -> (out_h*W, 9*Cp), tap-major (dy, dx) column order,
        # matching the (9*Cp, Cp) weight reshape done in the wrapper.
        cols = [src[dy:dy + out_h, dx:dx + W, :]
                for dy in range(3) for dx in range(3)]
        return jnp.concatenate(cols, axis=-1).reshape(out_h * W, 9 * Cp)

    # ---- conv1 + bias + ReLU over act rows r0-1 .. r0+TH (TH+2 rows incl. conv2 halo) ----
    p1 = im2col(xslab_m, TH + 2)                    # ((TH+2)*W, 9*Cp) bf16
    y1 = jnp.dot(p1, w1_ref[...], preferred_element_type=jnp.float32)
    act = jnp.maximum(y1 + b1_ref[...], 0.0).reshape(TH + 2, W, Cp)

    # conv2's SAME zero padding: activation rows outside the image must be zero
    # (not conv1-of-zeros), so mask the halo rows at the image boundary.
    a_rows = r0 - 1 + jax.lax.broadcasted_iota(jnp.int32, (TH + 2, 1, 1), 0)
    act = jnp.where((a_rows >= 0) & (a_rows <= H - 1), act, 0.0)

    # ---- zero width-halo in bf16, conv2 + bias: single MXU matmul ----
    act = act.astype(jnp.bfloat16)
    zcol = jnp.zeros((TH + 2, 1, Cp), jnp.bfloat16)
    apad = jnp.concatenate([zcol, act, zcol], axis=1)            # (TH+2, W+2, Cp)

    p2 = im2col(apad, TH)                                        # (TH*W, 9*Cp) bf16
    y2 = jnp.dot(p2, w2_ref[...], preferred_element_type=jnp.float32) + b2_ref[...]

    out = y2 * res_scale + x_res
    out_ref[0] = out.reshape(TH, W, Cp).astype(out_ref.dtype)


def _pick_tile_h(H, W, Cp, budget_bytes=24 * 1024 * 1024):
    """Largest divisor of H whose per-step live VMEM (bf16 patch matrices dominate) fits."""
    for th in range(H, 0, -1):
        if H % th:
            continue
        patches = ((th + 2) + th) * W * 9 * Cp * 2          # bf16 conv1 + conv2 patches
        other = 3 * (th + 2) * W * Cp * 4                   # act / halo / residual (f32)
        if patches + other <= budget_bytes:
            return th
    return 1


@functools.partial(jax.jit, static_argnames=("res_scale", "tile_h"))
def resblock_forward(x_nchw, w1, b1, w2, b2, *, res_scale=1.0, tile_h=None):
    """x_nchw: (B, C, H, W).  w*: (3, 3, C, C) HWIO.  b*: (C,)."""
    B, C, H, W = x_nchw.shape
    Cp = ((C + 127) // 128) * 128                            # lane-dense channel dim

    TH = tile_h if tile_h is not None else _pick_tile_h(H, W, Cp)
    assert H % TH == 0, "tile_h must divide H"
    nH = H // TH

    x = jnp.transpose(x_nchw, (0, 2, 3, 1))                  # NHWC (channels on lanes)
    # 2-row H halo (conv2 needs conv1's halo rows recomputed per tile), 1-col W halo,
    # channel pad to Cp — one fused pad under jit.
    xpad = jnp.pad(x, ((0, 0), (2, 2), (1, 1), (0, Cp - C)))
    # Overlapping per-tile slabs (halo rows duplicated so plain Blocked specs apply).
    xslabs = jnp.stack([xpad[:, t * TH: t * TH + TH + 4] for t in range(nH)], axis=1)
    # -> (B, nH, TH+4, W+2, Cp)

    def prep_w(w):   # (3,3,C,C) HWIO -> (9*Cp, Cp) bf16; rows are (dy, dx, cin)-major
        wp = jnp.pad(w, ((0, 0), (0, 0), (0, Cp - C), (0, Cp - C)))
        return wp.astype(jnp.bfloat16).reshape(9 * Cp, Cp)

    def prep_b(b):   # keep biases f32 (added to the f32 accumulator, negligible DMA)
        return jnp.pad(b, (0, Cp - C)).astype(jnp.float32).reshape(1, Cp)

    kernel = functools.partial(_resblock_kernel, res_scale=float(res_scale), H=H)
    out_nhwc = pl.pallas_call(
        kernel,
        out_shape=jax.ShapeDtypeStruct((B, H, W, Cp), x.dtype),
        grid_spec=pltpu.PrefetchScalarGridSpec(
            num_scalar_prefetch=0,
            grid=(B, nH),
            in_specs=[
                pl.BlockSpec((1, 1, TH + 4, W + 2, Cp), lambda b, t: (b, t, 0, 0, 0)),
                pl.BlockSpec((9 * Cp, Cp), lambda b, t: (0, 0)),   # weights: constant block,
                pl.BlockSpec((1, Cp), lambda b, t: (0, 0)),        # DMA'd once, stay resident
                pl.BlockSpec((9 * Cp, Cp), lambda b, t: (0, 0)),
                pl.BlockSpec((1, Cp), lambda b, t: (0, 0)),
            ],
            out_specs=pl.BlockSpec((1, TH, W, Cp), lambda b, t: (b, t, 0, 0)),
        ),
        compiler_params=pltpu.CompilerParams(
            dimension_semantics=("parallel", "parallel"),
            vmem_limit_bytes=48 * 1024 * 1024,
        ),
    )(xslabs, prep_w(w1), prep_b(b1), prep_w(w2), prep_b(b2))

    return jnp.transpose(out_nhwc[..., :C], (0, 3, 1, 2))     # back to NCHW


def _ref_resblock(x_nchw, w1, b1, w2, b2, res_scale=1.0):
    """Pure-JAX reference (lax conv, f32) for validation."""
    x = jnp.transpose(x_nchw, (0, 2, 3, 1))
    dn = jax.lax.conv_dimension_numbers(x.shape, w1.shape, ('NHWC', 'HWIO', 'NHWC'))
    y = jax.lax.conv_general_dilated(x, w1, (1, 1), 'SAME', dimension_numbers=dn) + b1
    y = jnp.maximum(y, 0.0)
    y = jax.lax.conv_general_dilated(y, w2, (1, 1), 'SAME', dimension_numbers=dn) + b2
    out = y * res_scale + x
    return jnp.transpose(out, (0, 3, 1, 2))


if __name__ == "__main__":
    B, C, H, W = 2, 4, 16, 16
    key = jax.random.PRNGKey(0)
    kx, kw1, kb1, kw2, kb2 = jax.random.split(key, 5)

    x = jax.random.normal(kx, (B, C, H, W), dtype=jnp.float32)
    # Deterministic synthetic conv parameters (HWIO), ResBlock(conv, n_c=C, k=3, bias=True)
    w1 = 0.1 * jax.random.normal(kw1, (3, 3, C, C), dtype=jnp.float32)
    b1 = 0.1 * jax.random.normal(kb1, (C,), dtype=jnp.float32)
    w2 = 0.1 * jax.random.normal(kw2, (3, 3, C, C), dtype=jnp.float32)
    b2 = 0.1 * jax.random.normal(kb2, (C,), dtype=jnp.float32)

    ref = _ref_resblock(x, w1, b1, w2, b2, res_scale=1.0)

    # Multi-tile path (grid = (B, 2)) — exercises the H-tiling + halo masking.
    out_tiled = jax.block_until_ready(
        resblock_forward(x, w1, b1, w2, b2, res_scale=1.0, tile_h=8))
    # Auto tile size (single tile at this shape).
    out_auto = jax.block_until_ready(
        resblock_forward(x, w1, b1, w2, b2, res_scale=1.0))

    assert out_tiled.shape == (B, C, H, W)
    assert jnp.allclose(out_tiled, ref, rtol=5e-2, atol=1e-2), "tiled mismatch vs reference"
    assert jnp.allclose(out_auto, ref, rtol=5e-2, atol=1e-2), "auto mismatch vs reference"

    print("KERNEL_OK")
</pallas_src>

<mosaic_0001>
module attributes {stable_mosaic.version = 11 : i64} {
  func.func @_resblock_kernel(%arg0: i32, %arg1: i32, %arg2: memref<1x1x12x18x128xf32, #tpu.memory_space<vmem>>, %arg3: memref<1152x128xbf16, #tpu.memory_space<vmem>>, %arg4: memref<1x128xf32, #tpu.memory_space<vmem>>, %arg5: memref<1152x128xbf16, #tpu.memory_space<vmem>>, %arg6: memref<1x128xf32, #tpu.memory_space<vmem>>, %arg7: memref<1x8x16x128xf32, #tpu.memory_space<vmem>>) attributes {dimension_semantics = [#tpu.dimension_semantics<parallel>, #tpu.dimension_semantics<parallel>], iteration_bounds = array<i64: 2, 2>, scalar_prefetch = 0 : i64, scratch_operands = 0 : i64, tpu.core_type = #tpu.core_type<tc>, window_params = [{transform_indices = @transform_0, window_bounds = array<i64: 1, 1, 12, 18, 128>}, {pipeline_mode = #tpu.pipeline_mode<synchronous>, transform_indices = @transform_1, window_bounds = array<i64: 1152, 128>}, {pipeline_mode = #tpu.pipeline_mode<synchronous>, transform_indices = @transform_2, window_bounds = array<i64: 1, 128>}, {pipeline_mode = #tpu.pipeline_mode<synchronous>, transform_indices = @transform_3, window_bounds = array<i64: 1152, 128>}, {pipeline_mode = #tpu.pipeline_mode<synchronous>, transform_indices = @transform_4, window_bounds = array<i64: 1, 128>}, {transform_indices = @transform_5, window_bounds = array<i64: 1, 8, 16, 128>}]} {
    %c8_i32 = arith.constant 8 : i32
    %0 = arith.muli %arg1, %c8_i32 : i32
    %c0 = arith.constant 0 : index
    %c0_0 = arith.constant 0 : index
    %c0_1 = arith.constant 0 : index
    %c0_2 = arith.constant 0 : index
    %c0_3 = arith.constant 0 : index
    %1 = vector.load %arg2[%c0, %c0_0, %c0_1, %c0_2, %c0_3] : memref<1x1x12x18x128xf32, #tpu.memory_space<vmem>>, vector<1x1x12x18x128xf32>
    %2 = vector.shape_cast %1 : vector<1x1x12x18x128xf32> to vector<12x18x128xf32>
    %3 = vector.extract_strided_slice %2 {offsets = [2, 1, 0], sizes = [8, 16, 128], strides = [1, 1, 1]} : vector<12x18x128xf32> to vector<8x16x128xf32>
    %4 = vector.shape_cast %3 : vector<8x16x128xf32> to vector<128x128xf32>
    %5 = arith.truncf %2 : vector<12x18x128xf32> to vector<12x18x128xbf16>
    %6 = vector.extract_strided_slice %5 {offsets = [0, 0, 0], sizes = [10, 16, 128], strides = [1, 1, 1]} : vector<12x18x128xbf16> to vector<10x16x128xbf16>
    %7 = vector.extract_strided_slice %5 {offsets = [0, 1, 0], sizes = [10, 16, 128], strides = [1, 1, 1]} : vector<12x18x128xbf16> to vector<10x16x128xbf16>
    %8 = vector.extract_strided_slice %5 {offsets = [0, 2, 0], sizes = [10, 16, 128], strides = [1, 1, 1]} : vector<12x18x128xbf16> to vector<10x16x128xbf16>
    %9 = vector.extract_strided_slice %5 {offsets = [1, 0, 0], sizes = [10, 16, 128], strides = [1, 1, 1]} : vector<12x18x128xbf16> to vector<10x16x128xbf16>
    %10 = vector.extract_strided_slice %5 {offsets = [1, 1, 0], sizes = [10, 16, 128], strides = [1, 1, 1]} : vector<12x18x128xbf16> to vector<10x16x128xbf16>
    %11 = vector.extract_strided_slice %5 {offsets = [1, 2, 0], sizes = [10, 16, 128], strides = [1, 1, 1]} : vector<12x18x128xbf16> to vector<10x16x128xbf16>
    %12 = vector.extract_strided_slice %5 {offsets = [2, 0, 0], sizes = [10, 16, 128], strides = [1, 1, 1]} : vector<12x18x128xbf16> to vector<10x16x128xbf16>
    %13 = vector.extract_strided_slice %5 {offsets = [2, 1, 0], sizes = [10, 16, 128], strides = [1, 1, 1]} : vector<12x18x128xbf16> to vector<10x16x128xbf16>
    %14 = vector.extract_strided_slice %5 {offsets = [2, 2, 0], sizes = [10, 16, 128], strides = [1, 1, 1]} : vector<12x18x128xbf16> to vector<10x16x128xbf16>
    %15 = tpu.concatenate %6, %7, %8, %9, %10, %11, %12, %13, %14 in 2 : vector<10x16x128xbf16>, vector<10x16x128xbf16>, vector<10x16x128xbf16>, vector<10x16x128xbf16>, vector<10x16x128xbf16>, vector<10x16x128xbf16>, vector<10x16x128xbf16>, vector<10x16x128xbf16>, vector<10x16x128xbf16> -> vector<10x16x1152xbf16>
    %16 = vector.shape_cast %15 : vector<10x16x1152xbf16> to vector<160x1152xbf16>
    %c0_4 = arith.constant 0 : index
    %c0_5 = arith.constant 0 : index
    %17 = vector.load %arg3[%c0_4, %c0_5] : memref<1152x128xbf16, #tpu.memory_space<vmem>>, vector<1152x128xbf16>
    %cst = arith.constant dense<0.000000e+00> : vector<160x128xf32>
    %18 = tpu.matmul %16, %17, %cst {dimension_numbers = #tpu.dot_dimension_numbers<[1], [0], [0], [1], [0, 0, 1, 1], [], []>} : vector<160x1152xbf16>, vector<1152x128xbf16>, vector<160x128xf32> -> vector<160x128xf32>
    %c0_6 = arith.constant 0 : index
    %c0_7 = arith.constant 0 : index
    %19 = vector.load %arg4[%c0_6, %c0_7] : memref<1x128xf32, #tpu.memory_space<vmem>>, vector<1x128xf32>
    %20 = vector.broadcast %19 : vector<1x128xf32> to vector<160x128xf32>
    %21 = arith.addf %18, %20 : vector<160x128xf32>
    %cst_8 = arith.constant 0.000000e+00 : f32
    %22 = vector.broadcast %cst_8 : f32 to vector<160x128xf32>
    %23 = arith.maximumf %21, %22 : vector<160x128xf32>
    %24 = vector.shape_cast %23 : vector<160x128xf32> to vector<10x16x128xf32>
    %c1_i32 = arith.constant 1 : i32
    %25 = arith.subi %0, %c1_i32 : i32
    %26 = tpu.iota {dimensions = array<i32: 0>} : vector<10x1x1xi32>
    %27 = vector.broadcast %25 : i32 to vector<10x1x1xi32>
    %28 = arith.addi %27, %26 : vector<10x1x1xi32>
    %c0_i32 = arith.constant 0 : i32
    %29 = vector.broadcast %c0_i32 : i32 to vector<10x1x1xi32>
    %30 = arith.cmpi sge, %28, %29 : vector<10x1x1xi32>
    %c15_i32 = arith.constant 15 : i32
    %31 = vector.broadcast %c15_i32 : i32 to vector<10x1x1xi32>
    %32 = arith.cmpi sle, %28, %31 : vector<10x1x1xi32>
    %33 = arith.andi %30, %32 : vector<10x1x1xi1>
    %cst_9 = arith.constant 0.000000e+00 : f32
    %34 = vector.shape_cast %33 : vector<10x1x1xi1> to vector<10x1x1xi1>
    %35 = vector.broadcast %34 : vector<10x1x1xi1> to vector<10x16x128xi1>
    %36 = vector.broadcast %cst_9 : f32 to vector<10x16x128xf32>
    %37 = arith.select %35, %24, %36 : vector<10x16x128xi1>, vector<10x16x128xf32>
    %38 = arith.truncf %37 : vector<10x16x128xf32> to vector<10x16x128xbf16>
    %cst_10 = arith.constant 0.000000e+00 : bf16
    %39 = vector.broadcast %cst_10 : bf16 to vector<10x1x128xbf16>
    %40 = tpu.concatenate %39, %38, %39 in 1 : vector<10x1x128xbf16>, vector<10x16x128xbf16>, vector<10x1x128xbf16> -> vector<10x18x128xbf16>
    %41 = vector.extract_strided_slice %40 {offsets = [0, 0, 0], sizes = [8, 16, 128], strides = [1, 1, 1]} : vector<10x18x128xbf16> to vector<8x16x128xbf16>
    %42 = vector.extract_strided_slice %40 {offsets = [0, 1, 0], sizes = [8, 16, 128], strides = [1, 1, 1]} : vector<10x18x128xbf16> to vector<8x16x128xbf16>
    %43 = vector.extract_strided_slice %40 {offsets = [0, 2, 0], sizes = [8, 16, 128], strides = [1, 1, 1]} : vector<10x18x128xbf16> to vector<8x16x128xbf16>
    %44 = vector.extract_strided_slice %40 {offsets = [1, 0, 0], sizes = [8, 16, 128], strides = [1, 1, 1]} : vector<10x18x128xbf16> to vector<8x16x128xbf16>
    %45 = vector.extract_strided_slice %40 {offsets = [1, 1, 0], sizes = [8, 16, 128], strides = [1, 1, 1]} : vector<10x18x128xbf16> to vector<8x16x128xbf16>
    %46 = vector.extract_strided_slice %40 {offsets = [1, 2, 0], sizes = [8, 16, 128], strides = [1, 1, 1]} : vector<10x18x128xbf16> to vector<8x16x128xbf16>
    %47 = vector.extract_strided_slice %40 {offsets = [2, 0, 0], sizes = [8, 16, 128], strides = [1, 1, 1]} : vector<10x18x128xbf16> to vector<8x16x128xbf16>
    %48 = vector.extract_strided_slice %40 {offsets = [2, 1, 0], sizes = [8, 16, 128], strides = [1, 1, 1]} : vector<10x18x128xbf16> to vector<8x16x128xbf16>
    %49 = vector.extract_strided_slice %40 {offsets = [2, 2, 0], sizes = [8, 16, 128], strides = [1, 1, 1]} : vector<10x18x128xbf16> to vector<8x16x128xbf16>
    %50 = tpu.concatenate %41, %42, %43, %44, %45, %46, %47, %48, %49 in 2 : vector<8x16x128xbf16>, vector<8x16x128xbf16>, vector<8x16x128xbf16>, vector<8x16x128xbf16>, vector<8x16x128xbf16>, vector<8x16x128xbf16>, vector<8x16x128xbf16>, vector<8x16x128xbf16>, vector<8x16x128xbf16> -> vector<8x16x1152xbf16>
    %51 = vector.shape_cast %50 : vector<8x16x1152xbf16> to vector<128x1152xbf16>
    %c0_11 = arith.constant 0 : index
    %c0_12 = arith.constant 0 : index
    %52 = vector.load %arg5[%c0_11, %c0_12] : memref<1152x128xbf16, #tpu.memory_space<vmem>>, vector<1152x128xbf16>
    %cst_13 = arith.constant dense<0.000000e+00> : vector<128x128xf32>
    %53 = tpu.matmul %51, %52, %cst_13 {dimension_numbers = #tpu.dot_dimension_numbers<[1], [0], [0], [1], [0, 0, 1, 1], [], []>} : vector<128x1152xbf16>, vector<1152x128xbf16>, vector<128x128xf32> -> vector<128x128xf32>
    %c0_14 = arith.constant 0 : index
    %c0_15 = arith.constant 0 : index
    %54 = vector.load %arg6[%c0_14, %c0_15] : memref<1x128xf32, #tpu.memory_space<vmem>>, vector<1x128xf32>
    %55 = vector.broadcast %54 : vector<1x128xf32> to vector<128x128xf32>
    %56 = arith.addf %53, %55 : vector<128x128xf32>
    %cst_16 = arith.constant 1.000000e+00 : f32
    %57 = vector.broadcast %cst_16 : f32 to vector<128x128xf32>
    %58 = arith.mulf %56, %57 : vector<128x128xf32>
    %59 = arith.addf %58, %4 : vector<128x128xf32>
    %60 = vector.shape_cast %59 : vector<128x128xf32> to vector<8x16x128xf32>
    %c0_17 = arith.constant 0 : index
    %c0_18 = arith.constant 0 : index
    %c0_19 = arith.constant 0 : index
    %c0_20 = arith.constant 0 : index
    %61 = vector.load %arg7[%c0_17, %c0_18, %c0_19, %c0_20] : memref<1x8x16x128xf32, #tpu.memory_space<vmem>>, vector<1x8x16x128xf32>
    %62 = vector.shape_cast %61 : vector<1x8x16x128xf32> to vector<8x16x128xf32>
    %63 = vector.shape_cast %60 : vector<8x16x128xf32> to vector<1x8x16x128xf32>
    tpu.vector_store %arg7[%c0_17, %c0_18, %c0_19, %c0_20], %63 {strides = array<i32>} : memref<1x8x16x128xf32, #tpu.memory_space<vmem>>, vector<1x8x16x128xf32>,
    return
  }
  func.func @transform_0(%arg0: i32, %arg1: i32) -> (i32, i32, i32, i32, i32) {
    %c0_i32 = arith.constant 0 : i32
    %c0_i32_0 = arith.constant 0 : i32
    %c0_i32_1 = arith.constant 0 : i32
    %c0_i32_2 = arith.constant 0 : i32
    return %arg0, %arg1, %c0_i32, %c0_i32_0, %c0_i32_1 : i32, i32, i32, i32, i32
  }
  func.func @transform_1(%arg0: i32, %arg1: i32) -> (i32, i32) {
    %c0_i32 = arith.constant 0 : i32
    %c0_i32_0 = arith.constant 0 : i32
    %c0_i32_1 = arith.constant 0 : i32
    return %c0_i32, %c0_i32_0 : i32, i32
  }
  func.func @transform_2(%arg0: i32, %arg1: i32) -> (i32, i32) {
    %c0_i32 = arith.constant 0 : i32
    %c0_i32_0 = arith.constant 0 : i32
    %c0_i32_1 = arith.constant 0 : i32
    return %c0_i32, %c0_i32_0 : i32, i32
  }
  func.func @transform_3(%arg0: i32, %arg1: i32) -> (i32, i32) {
    %c0_i32 = arith.constant 0 : i32
    %c0_i32_0 = arith.constant 0 : i32
    %c0_i32_1 = arith.constant 0 : i32
    return %c0_i32, %c0_i32_0 : i32, i32
  }
  func.func @transform_4(%arg0: i32, %arg1: i32) -> (i32, i32) {
    %c0_i32 = arith.constant 0 : i32
    %c0_i32_0 = arith.constant 0 : i32
    %c0_i32_1 = arith.constant 0 : i32
    return %c0_i32, %c0_i32_0 : i32, i32
  }
  func.func @transform_5(%arg0: i32, %arg1: i32) -> (i32, i32, i32, i32) {
    %c0_i32 = arith.constant 0 : i32
    %c0_i32_0 = arith.constant 0 : i32
    %c0_i32_1 = arith.constant 0 : i32
    return %arg0, %arg1, %c0_i32, %c0_i32_0 : i32, i32, i32, i32
  }
}

</mosaic_0001>

<llo_original>
// kernel: resblock_forward.1
$region0: #{resblock_forward.1}
  #allocation0 [shape = 'u32[]', space=smem, size = 0x4, offset = 0x4, fixed_abs, tag = 'smem constant byte address 0x4 - core index']
  #allocation1 [shape = 'u32[144,128]{1,0:T(1,128)}', space=vmem, size = 0x12000, scoped, tag = 'internal scratch']
  %s0 = inlined_call_operand.vmem [shape: f32[2,2,12,18,128], index: 0, kind: input, shape index: {}]
  %s1 = inlined_call_operand.vmem [shape: bf16[1152,128], index: 1, kind: input, shape index: {}]
  %s2 = inlined_call_operand.vmem [shape: f32[1,128], index: 2, kind: input, shape index: {}]
  %s3 = inlined_call_operand.vmem [shape: bf16[1152,128], index: 3, kind: input, shape index: {}]
  %s4 = inlined_call_operand.vmem [shape: f32[1,128], index: 4, kind: input, shape index: {}]
  %s5 = inlined_call_operand.vmem [shape: f32[2,16,16,128], index: 5, kind: output, shape index: {}]
  %s6 = sld [smem:[#allocation0]]
  $region53: #{resblock_forward.1} parent=0
    _
  %s8 = ssub.s32 1, %s6
  %s9 = scalar_select 0, %s8, %s6
  loop: start=0, step=1, limit=6
  $region2: #{resblock_forward.1} parent=0 // loop_pre_header
    _
  $region3: #{resblock_forward.1} parent=0 // loop_header
    %s11 = sphi 0, %s15
    %p12 = scmp.ge.s32.totalorder %s11, 6
    %s18 = sphi 0, %s30
    %s19 = sphi 0, %s26
    %s20 = sphi 0, %s18
    %s21 = sphi 0, %s19
    %s22 = sphi 0, %s20
    %s23 = sphi 0, %s21
    %s35 = sphi 0, %s37
    %s38 = sphi 0, %s35
    %s39 = sphi 0, %s38
    %s55 = sphi 0, %s39
    %s59 = sphi 0, %s59
    %s61 = sphi 0, %s59
    %s62 = sphi 0, %s61
    %s76 = sphi 0, %s62
    %s80 = sphi 0, %s80
    %s82 = sphi 0, %s80
    %s83 = sphi 0, %s82
    %s97 = sphi 0, %s83
    %s101 = sphi 0, %s101
    %s103 = sphi 0, %s101
    %s104 = sphi 0, %s103
    %s118 = sphi 0, %s104
    %s122 = sphi 0, %s122
    %s124 = sphi 0, %s122
    %s125 = sphi 0, %s124
    %s139 = sphi 0, %s125
    %s147 = sphi 0, %s149
    %s150 = sphi 0, %s147
    %s151 = sphi 0, %s150
    %s167 = sphi 0, %s151
  $region4: #{resblock_forward.1} parent=0 // loop_header_branch
    %14 = sbr.rel (%p12) target = $region8
  $region5: #{resblock_forward.1} parent=0 // loop_body
    %s16 = ssub.s32 %s11, 1
    %s17 = ssub.s32 %s11, 2
    %s24 = sadd.s32 1, %s19
    %p25 = scmp.ge.s32.totalorder %s24, 2
    %s26 = scalar_select %p25, 0, %s24
    %s27 = sadd.s32 1, %s18
    %s28 = scalar_select %p25, %s27, %s18
    %p29 = scmp.ge.s32.totalorder %s28, 2
    %s30 = scalar_select %p29, 0, %s28
    %s31 = ssub.s32 %s18, %s30
    %s32 = ssub.s32 %s19, %s26
    %s33 = sor.u32 %s31, %s32
    %p34 = scmp.eq.s32.totalorder %s33, 0
    %s36 = sadd.s32 %s35, 1
    %s37 = scalar_select %p34, %s35, %s36
    %p40 = pneg %p34
    %p41 = scmp.eq.s32.totalorder %s11, 3
    %p42 = por %p40, %p41
    %p43 = scmp.ne.s32.totalorder %s35, %s38
    %p44 = scmp.eq.s32.totalorder %s11, 0
    %p45 = por %p43, %p44
    %p46 = scmp.ne.s32.totalorder %s35, %s38
    %p47 = scmp.eq.s32.totalorder %s16, 3
    %p48 = por %p46, %p47
    %p49 = scmp.ne.s32.totalorder %s38, %s39
    %p50 = scmp.eq.s32.totalorder %s16, 0
    %p51 = por %p49, %p50
    %p52 = scmp.ne.s32.totalorder %s38, %s39
    %p53 = scmp.eq.s32.totalorder %s17, 3
    %p54 = por %p52, %p53
    %p56 = scmp.ne.s32.totalorder %s39, %s55
    %p57 = scmp.eq.s32.totalorder %s17, 0
    %p58 = por %p56, %p57
    %s60 = sadd.s32 %s59, 1
    %p63 = scmp.eq.s32.totalorder %s11, 3
    %p64 = scmp.ne.s32.totalorder %s59, %s61
    %p65 = scmp.eq.s32.totalorder %s11, 0
    %p66 = por %p64, %p65
    %p67 = scmp.ne.s32.totalorder %s59, %s61
    %p68 = scmp.eq.s32.totalorder %s16, 3
    %p69 = por %p67, %p68
    %p70 = scmp.ne.s32.totalorder %s61, %s62
    %p71 = scmp.eq.s32.totalorder %s16, 0
    %p72 = por %p70, %p71
    %p73 = scmp.ne.s32.totalorder %s61, %s62
    %p74 = scmp.eq.s32.totalorder %s17, 3
    %p75 = por %p73, %p74
    %p77 = scmp.ne.s32.totalorder %s62, %s76
    %p78 = scmp.eq.s32.totalorder %s17, 0
    %p79 = por %p77, %p78
    %s81 = sadd.s32 %s80, 1
    %p84 = scmp.eq.s32.totalorder %s11, 3
    %p85 = scmp.ne.s32.totalorder %s80, %s82
    %p86 = scmp.eq.s32.totalorder %s11, 0
    %p87 = por %p85, %p86
    %p88 = scmp.ne.s32.totalorder %s80, %s82
    %p89 = scmp.eq.s32.totalorder %s16, 3
    %p90 = por %p88, %p89
    %p91 = scmp.ne.s32.totalorder %s82, %s83
    %p92 = scmp.eq.s32.totalorder %s16, 0
    %p93 = por %p91, %p92
    %p94 = scmp.ne.s32.totalorder %s82, %s83
    %p95 = scmp.eq.s32.totalorder %s17, 3
    %p96 = por %p94, %p95
    %p98 = scmp.ne.s32.totalorder %s83, %s97
    %p99 = scmp.eq.s32.totalorder %s17, 0
    %p100 = por %p98, %p99
    %s102 = sadd.s32 %s101, 1
    %p105 = scmp.eq.s32.totalorder %s11, 3
    %p106 = scmp.ne.s32.totalorder %s101, %s103
    %p107 = scmp.eq.s32.totalorder %s11, 0
    %p108 = por %p106, %p107
    %p109 = scmp.ne.s32.totalorder %s101, %s103
    %p110 = scmp.eq.s32.totalorder %s16, 3
    %p111 = por %p109, %p110
    %p112 = scmp.ne.s32.totalorder %s103, %s104
    %p113 = scmp.eq.s32.totalorder %s16, 0
    %p114 = por %p112, %p113
    %p115 = scmp.ne.s32.totalorder %s103, %s104
    %p116 = scmp.eq.s32.totalorder %s17, 3
    %p117 = por %p115, %p116
    %p119 = scmp.ne.s32.totalorder %s104, %s118
    %p120 = scmp.eq.s32.totalorder %s17, 0
    %p121 = por %p119, %p120
    %s123 = sadd.s32 %s122, 1
    %p126 = scmp.eq.s32.totalorder %s11, 3
    %p127 = scmp.ne.s32.totalorder %s122, %s124
    %p128 = scmp.eq.s32.totalorder %s11, 0
    %p129 = por %p127, %p128
    %p130 = scmp.ne.s32.totalorder %s122, %s124
    %p131 = scmp.eq.s32.totalorder %s16, 3
    %p132 = por %p130, %p131
    %p133 = scmp.ne.s32.totalorder %s124, %s125
    %p134 = scmp.eq.s32.totalorder %s16, 0
    %p135 = por %p133, %p134
    %p136 = scmp.ne.s32.totalorder %s124, %s125
    %p137 = scmp.eq.s32.totalorder %s17, 3
    %p138 = por %p136, %p137
    %p140 = scmp.ne.s32.totalorder %s125, %s139
    %p141 = scmp.eq.s32.totalorder %s17, 0
    %p142 = por %p140, %p141
    %s143 = ssub.s32 %s18, %s30
    %s144 = ssub.s32 %s19, %s26
    %s145 = sor.u32 %s143, %s144
    %p146 = scmp.eq.s32.totalorder %s145, 0
    %s148 = sadd.s32 %s147, 1
    %s149 = scalar_select %p146, %s147, %s148
    %p152 = pneg %p146
    %p153 = scmp.eq.s32.totalorder %s11, 3
    %p154 = por %p152, %p153
    %p155 = scmp.ne.s32.totalorder %s147, %s150
    %p156 = scmp.eq.s32.totalorder %s11, 0
    %p157 = por %p155, %p156
    %p158 = scmp.ne.s32.totalorder %s147, %s150
    %p159 = scmp.eq.s32.totalorder %s16, 3
    %p160 = por %p158, %p159
    %p161 = scmp.ne.s32.totalorder %s150, %s151
    %p162 = scmp.eq.s32.totalorder %s16, 0
    %p163 = por %p161, %p162
    %p164 = scmp.ne.s32.totalorder %s150, %s151
    %p165 = scmp.eq.s32.totalorder %s17, 3
    %p166 = por %p164, %p165
    %p168 = scmp.ne.s32.totalorder %s151, %s167
    %p169 = scmp.eq.s32.totalorder %s17, 0
    %p170 = por %p168, %p169
    %p171 = scmp.le.s32.totalorder 1, %s11
    %p172 = scmp.lt.s32.totalorder %s11, 5
    %p173 = pnand %p171, %p172
    %p174 = pneg %p173
    // Predicated region
    $region9: #{resblock_forward.1} parent=5 // pred_check
      _
    $region10: #{resblock_forward.1} parent=5 // pred_check_branch
      %176 = sbr.rel (%p173) target = $region12
    $region11: #{resblock_forward.1} parent=5 // pred_region
      %s177 = ssub.s32 %s11, 1
      // Predicated region
      $region13: #{resblock_forward.1} parent=11 // pred_check
        %p178 = pneg %p72
      $region14: #{resblock_forward.1} parent=11 // pred_check_branch
        %180 = sbr.rel (%p178) target = $region16
      $region15: #{resblock_forward.1} parent=11 // pred_region
        _
      $region16: #{resblock_forward.1} parent=11 // pred_fallthru
        _
      // Predicated region
      $region17: #{resblock_forward.1} parent=11 // pred_check
        %p181 = pneg %p93
      $region18: #{resblock_forward.1} parent=11 // pred_check_branch
        %183 = sbr.rel (%p181) target = $region20
      $region19: #{resblock_forward.1} parent=11 // pred_region
        _
      $region20: #{resblock_forward.1} parent=11 // pred_fallthru
        _
      // Predicated region
      $region21: #{resblock_forward.1} parent=11 // pred_check
        %p184 = pneg %p114
      $region22: #{resblock_forward.1} parent=11 // pred_check_branch
        %186 = sbr.rel (%p184) target = $region24
      $region23: #{resblock_forward.1} parent=11 // pred_region
        _
      $region24: #{resblock_forward.1} parent=11 // pred_fallthru
        _
      // Predicated region
      $region25: #{resblock_forward.1} parent=11 // pred_check
        %p187 = pneg %p135
      $region26: #{resblock_forward.1} parent=11 // pred_check_branch
        %189 = sbr.rel (%p187) target = $region28
      $region27: #{resblock_forward.1} parent=11 // pred_region
        _
      $region28: #{resblock_forward.1} parent=11 // pred_fallthru
        _
    $region12: #{resblock_forward.1} parent=5 // pred_fallthru
      _
    %p190 = scmp.lt.s32.totalorder %s11, 4
    // Predicated region
    $region29: #{resblock_forward.1} parent=5 // pred_check
      %p191 = pneg %p190
    $region30: #{resblock_forward.1} parent=5 // pred_check_branch
      %193 = sbr.rel (%p191) target = $region32
    $region31: #{resblock_forward.1} parent=5 // pred_region
      // Predicated region
      $region33: #{resblock_forward.1} parent=31 // pred_check
        %p194 = pneg %p45
      $region34: #{resblock_forward.1} parent=31 // pred_check_branch
        %196 = sbr.rel (%p194) target = $region36
      $region35: #{resblock_forward.1} parent=31 // pred_region
        %p197 = scmp.lt.s32.totalorder %s18, 1
        %s198 = scalar_select %p197, %s18, 1
        %p199 = scmp.lt.s32.totalorder %s19, 1
        %s200 = scalar_select %p199, %s19, 1
        %s201 = smul.addr %s200, 36
        %s202 = smul.addr %s198, 72
        %s203 = sadd.s32 %s201, %s202
        %s204 = smul.addr %s203, 8
        %s205 = scalar_lea.vmem %s0, %s204
      $region36: #{resblock_forward.1} parent=31 // pred_fallthru
        _
    $region32: #{resblock_forward.1} parent=5 // pred_fallthru
      _
    %p206 = scmp.le.s32.totalorder 1, %s11
    %p207 = scmp.lt.s32.totalorder %s11, 5
    %p208 = pnand %p206, %p207
    %p209 = pneg %p208
    // Predicated region
    $region37: #{resblock_forward.1} parent=5 // pred_check
      _
    $region38: #{resblock_forward.1} parent=5 // pred_check_branch
      %211 = sbr.rel (%p208) target = $region40
    $region39: #{resblock_forward.1} parent=5 // pred_region
      %s212 = ssub.s32 %s11, 1
      %p213 = scmp.lt.s32.totalorder %s20, 1
      %s214 = scalar_select %p213, %s20, 1
      %p215 = scmp.lt.s32.totalorder %s21, 1
      %s216 = scalar_select %p215, %s21, 1
      %s217 = smul.addr %s216, 36
      %s218 = smul.addr %s214, 72
      %s219 = sadd.s32 %s217, %s218
      %s220 = smul.addr %s219, 8
      %s221 = scalar_lea.vmem %s0, %s220
      %p222 = pneg %p51
      %p223 = pneg %p48
      %p224 = pneg %p72
      %p225 = pneg %p69
      %p226 = pneg %p93
      %p227 = pneg %p90
      %p228 = pneg %p114
      %p229 = pneg %p111
      %p230 = pneg %p135
      %p231 = pneg %p132
      %p232 = pneg %p163
      %p233 = pneg %p160
      %s234 = smul.u32 8, %s21
      %p235 = scmp.lt.s32.totalorder %s20, 1
      %s236 = scalar_select %p235, %s20, 1
      %p237 = scmp.lt.s32.totalorder %s234, 15
      %s238 = scalar_select %p237, %s234, 15
      %s239 = smul.addr %s238, 2
      %s240 = smul.addr %s236, 32
      %s241 = sadd.s32 %s239, %s240
      %s242 = smul.addr %s241, 8
      %s243 = scalar_lea.vmem %s5, %s242
      %p244 = scmp.lt.s32.totalorder %s20, 1
      %s245 = scalar_select %p244, %s20, 1
      %p246 = scmp.lt.s32.totalorder %s21, 1
      %s247 = scalar_select %p246, %s21, 1
      %s248 = smul.addr %s247, 36
      %s249 = smul.addr %s245, 72
      %s250 = sadd.s32 %s248, %s249
      %s251 = smul.addr %s250, 8
      %s252 = scalar_lea.vmem %s0, %s251
      %s253 = smul.u32 8, %s21
      %p254 = scmp.lt.s32.totalorder %s20, 1
      %s255 = scalar_select %p254, %s20, 1
      %p256 = scmp.lt.s32.totalorder %s253, 15
      %s257 = scalar_select %p256, %s253, 15
      %s258 = smul.addr %s257, 2
      %s259 = smul.addr %s255, 32
      %s260 = sadd.s32 %s258, %s259
      %s261 = smul.addr %s260, 8
      %s262 = scalar_lea.vmem %s5, %s261
      %s263 = smul.u32 8, %s21
      %s265 = smul.u32 %s21, 8
      %v266 = vld [vmem:[%s252] sm:$0xff]
      %v267 = vld [vmem:[%s252 + $0x8] sm:$0xff]
      %v268 = vld [vmem:[%s252 + $0x10] sm:$0x3]
      %v269 = vld [vmem:[%s252 + $0x18] sm:$0xff]
      %v270 = vld [vmem:[%s252 + $0x20] sm:$0xff]
      %v271 = vld [vmem:[%s252 + $0x28] sm:$0x3]
      %v272 = vld [vmem:[%s252 + $0x30] sm:$0xff]
      %v273 = vld [vmem:[%s252 + $0x38] sm:$0xff]
      %v274 = vld [vmem:[%s252 + $0x40] sm:$0x3]
      %v275 = vld [vmem:[%s252 + $0x48] sm:$0xff]
      %v276 = vld [vmem:[%s252 + $0x50] sm:$0xff]
      %v277 = vld [vmem:[%s252 + $0x58] sm:$0x3]
      %v278 = vld [vmem:[%s252 + $0x60] sm:$0xff]
      %v279 = vld [vmem:[%s252 + $0x68] sm:$0xff]
      %v280 = vld [vmem:[%s252 + $0x70] sm:$0x3]
      %v281 = vld [vmem:[%s252 + $0x78] sm:$0xff]
      %v282 = vld [vmem:[%s252 + $0x80] sm:$0xff]
      %v283 = vld [vmem:[%s252 + $0x88] sm:$0x3]
      %v284 = vld [vmem:[%s252 + $0x90] sm:$0xff]
      %v285 = vld [vmem:[%s252 + $0x98] sm:$0xff]
      %v286 = vld [vmem:[%s252 + $0xa0] sm:$0x3]
      %v287 = vld [vmem:[%s252 + $0xa8] sm:$0xff]
      %v288 = vld [vmem:[%s252 + $0xb0] sm:$0xff]
      %v289 = vld [vmem:[%s252 + $0xb8] sm:$0x3]
      %v290 = vld [vmem:[%s252 + $0xc0] sm:$0xff]
      %v291 = vld [vmem:[%s252 + $0xc8] sm:$0xff]
      %v292 = vld [vmem:[%s252 + $0xd0] sm:$0x3]
      %v293 = vld [vmem:[%s252 + $0xd8] sm:$0xff]
      %v294 = vld [vmem:[%s252 + $0xe0] sm:$0xff]
      %v295 = vld [vmem:[%s252 + $0xe8] sm:$0x3]
      %v296 = vld [vmem:[%s252 + $0xf0] sm:$0xff]
      %v297 = vld [vmem:[%s252 + $0xf8] sm:$0xff]
      %v298 = vld [vmem:[%s252 + $0x100] sm:$0x3]
      %v299 = vld [vmem:[%s252 + $0x108] sm:$0xff]
      %v300 = vld [vmem:[%s252 + $0x110] sm:$0xff]
      %v301 = vld [vmem:[%s252 + $0x118] sm:$0x3]
      %vm326 = vcmask 1046528
      %v327 = vrot.slane %v272, 1
      %v328 = vrot.slane %v273, 1
      %v329 = vsel %vm326, %v327, %v328
      %v330 = vrot.slane %v274, 1
      %v331 = vsel %vm326, %v328, %v330
      %v332 = vrot.slane %v275, 1
      %v333 = vrot.slane %v276, 1
      %v334 = vsel %vm326, %v332, %v333
      %v335 = vrot.slane %v277, 1
      %v336 = vsel %vm326, %v333, %v335
      %v337 = vrot.slane %v278, 1
      %v338 = vrot.slane %v279, 1
      %v339 = vsel %vm326, %v337, %v338
      %v340 = vrot.slane %v280, 1
      %v341 = vsel %vm326, %v338, %v340
      %v342 = vrot.slane %v281, 1
      %v343 = vrot.slane %v282, 1
      %v344 = vsel %vm326, %v342, %v343
      %v345 = vrot.slane %v283, 1
      %v346 = vsel %vm326, %v343, %v345
      %v347 = vrot.slane %v284, 1
      %v348 = vrot.slane %v285, 1
      %v349 = vsel %vm326, %v347, %v348
      %v350 = vrot.slane %v286, 1
      %v351 = vsel %vm326, %v348, %v350
      %v352 = vrot.slane %v287, 1
      %v353 = vrot.slane %v288, 1
      %v354 = vsel %vm326, %v352, %v353
      %v355 = vrot.slane %v289, 1
      %v356 = vsel %vm326, %v353, %v355
      %v357 = vrot.slane %v290, 1
      %v358 = vrot.slane %v291, 1
      %v359 = vsel %vm326, %v357, %v358
      %v360 = vrot.slane %v292, 1
      %v361 = vsel %vm326, %v358, %v360
      %v362 = vrot.slane %v293, 1
      %v363 = vrot.slane %v294, 1
      %v364 = vsel %vm326, %v362, %v363
      %v365 = vrot.slane %v295, 1
      %v366 = vsel %vm326, %v363, %v365
      %v383 = vpack.c.bf16 %v267, %v266
      %v384 = vpack.c.bf16 %v268, %v268
      %v385 = vpack.c.bf16 %v270, %v269
      %v386 = vpack.c.bf16 %v271, %v271
      %v387 = vpack.c.bf16 %v273, %v272
      %v388 = vpack.c.bf16 %v274, %v274
      %v389 = vpack.c.bf16 %v276, %v275
      %v390 = vpack.c.bf16 %v277, %v277
      %v391 = vpack.c.bf16 %v279, %v278
      %v392 = vpack.c.bf16 %v280, %v280
      %v393 = vpack.c.bf16 %v282, %v281
      %v394 = vpack.c.bf16 %v283, %v283
      %v395 = vpack.c.bf16 %v285, %v284
      %v396 = vpack.c.bf16 %v286, %v286
      %v397 = vpack.c.bf16 %v288, %v287
      %v398 = vpack.c.bf16 %v289, %v289
      %v399 = vpack.c.bf16 %v291, %v290
      %v400 = vpack.c.bf16 %v292, %v292
      %v401 = vpack.c.bf16 %v294, %v293
      %v402 = vpack.c.bf16 %v295, %v295
      %v403 = vpack.c.bf16 %v297, %v296
      %v404 = vpack.c.bf16 %v298, %v298
      %v405 = vpack.c.bf16 %v300, %v299
      %v406 = vpack.c.bf16 %v301, %v301
      %vm407 = vsmask.f32 7424
      %v409 = vshrl.u32 %v383, 16
      %v411 = vshll.u32 %v383, 16
      %v413 = vrot.slane %v411, 1
      %v414 = vor.u32 %v409, %v413
      %v416 = vshll.u32 %v384, 16
      %v418 = vrot.slane %v416, 1
      %v419 = vsel %vm407, %v414, %v418
      %v421 = vshrl.u32 %v385, 16
      %v423 = vshll.u32 %v385, 16
      %v425 = vrot.slane %v423, 1
      %v426 = vor.u32 %v421, %v425
      %v428 = vshll.u32 %v386, 16
      %v430 = vrot.slane %v428, 1
      %v431 = vsel %vm407, %v426, %v430
      %v433 = vshrl.u32 %v387, 16
      %v435 = vshll.u32 %v387, 16
      %v437 = vrot.slane %v435, 1
      %v438 = vor.u32 %v433, %v437
      %v440 = vshll.u32 %v388, 16
      %v442 = vrot.slane %v440, 1
      %v443 = vsel %vm407, %v438, %v442
      %v445 = vshrl.u32 %v389, 16
      %v447 = vshll.u32 %v389, 16
      %v449 = vrot.slane %v447, 1
      %v450 = vor.u32 %v445, %v449
      %v452 = vshll.u32 %v390, 16
      %v454 = vrot.slane %v452, 1
      %v455 = vsel %vm407, %v450, %v454
      %v457 = vshrl.u32 %v391, 16
      %v459 = vshll.u32 %v391, 16
      %v461 = vrot.slane %v459, 1
      %v462 = vor.u32 %v457, %v461
      %v464 = vshll.u32 %v392, 16
      %v466 = vrot.slane %v464, 1
      %v467 = vsel %vm407, %v462, %v466
      %v469 = vshrl.u32 %v393, 16
      %v471 = vshll.u32 %v393, 16
      %v473 = vrot.slane %v471, 1
      %v474 = vor.u32 %v469, %v473
      %v476 = vshll.u32 %v394, 16
      %v478 = vrot.slane %v476, 1
      %v479 = vsel %vm407, %v474, %v478
      %v481 = vshrl.u32 %v395, 16
      %v483 = vshll.u32 %v395, 16
      %v485 = vrot.slane %v483, 1
      %v486 = vor.u32 %v481, %v485
      %v488 = vshll.u32 %v396, 16
      %v490 = vrot.slane %v488, 1
      %v491 = vsel %vm407, %v486, %v490
      %v493 = vshrl.u32 %v397, 16
      %v495 = vshll.u32 %v397, 16
      %v497 = vrot.slane %v495, 1
      %v498 = vor.u32 %v493, %v497
      %v500 = vshll.u32 %v398, 16
      %v502 = vrot.slane %v500, 1
      %v503 = vsel %vm407, %v498, %v502
      %v505 = vshrl.u32 %v399, 16
      %v507 = vshll.u32 %v399, 16
      %v509 = vrot.slane %v507, 1
      %v510 = vor.u32 %v505, %v509
      %v512 = vshll.u32 %v400, 16
      %v514 = vrot.slane %v512, 1
      %v515 = vsel %vm407, %v510, %v514
      %v517 = vshrl.u32 %v401, 16
      %v519 = vshll.u32 %v401, 16
      %v521 = vrot.slane %v519, 1
      %v522 = vor.u32 %v517, %v521
      %v524 = vshll.u32 %v402, 16
      %v526 = vrot.slane %v524, 1
      %v527 = vsel %vm407, %v522, %v526
      %vm558 = vcmask 1046528
      %v559 = vrot.slane %v383, 1
      %v560 = vrot.slane %v384, 1
      %v561 = vsel %vm558, %v559, %v560
      %v562 = vrot.slane %v385, 1
      %v563 = vrot.slane %v386, 1
      %v564 = vsel %vm558, %v562, %v563
      %v565 = vrot.slane %v387, 1
      %v566 = vrot.slane %v388, 1
      %v567 = vsel %vm558, %v565, %v566
      %v568 = vrot.slane %v389, 1
      %v569 = vrot.slane %v390, 1
      %v570 = vsel %vm558, %v568, %v569
      %v571 = vrot.slane %v391, 1
      %v572 = vrot.slane %v392, 1
      %v573 = vsel %vm558, %v571, %v572
      %v574 = vrot.slane %v393, 1
      %v575 = vrot.slane %v394, 1
      %v576 = vsel %vm558, %v574, %v575
      %v577 = vrot.slane %v395, 1
      %v578 = vrot.slane %v396, 1
      %v579 = vsel %vm558, %v577, %v578
      %v580 = vrot.slane %v397, 1
      %v581 = vrot.slane %v398, 1
      %v582 = vsel %vm558, %v580, %v581
      %v583 = vrot.slane %v399, 1
      %v584 = vrot.slane %v400, 1
      %v585 = vsel %vm558, %v583, %v584
      %v586 = vrot.slane %v401, 1
      %v587 = vrot.slane %v402, 1
      %v588 = vsel %vm558, %v586, %v587
      %v600 = vshrl.u32 %v403, 16
      %v602 = vshll.u32 %v403, 16
      %v604 = vrot.slane %v602, 1
      %v605 = vor.u32 %v600, %v604
      %v607 = vshll.u32 %v404, 16
      %v609 = vrot.slane %v607, 1
      %v610 = vsel %vm407, %v605, %v609
      %v614 = vrot.slane %v403, 1
      %v615 = vrot.slane %v404, 1
      %v616 = vsel %vm558, %v614, %v615
      %v619 = vshrl.u32 %v405, 16
      %v621 = vshll.u32 %v405, 16
      %v623 = vrot.slane %v621, 1
      %v624 = vor.u32 %v619, %v623
      %v626 = vshll.u32 %v406, 16
      %v628 = vrot.slane %v626, 1
      %v629 = vsel %vm407, %v624, %v628
      %v633 = vrot.slane %v405, 1
      %v634 = vrot.slane %v406, 1
      %v635 = vsel %vm558, %v633, %v634
      %v637 = vld [vmem:[%s1] sm:$0xf]
      %v638 = vld [vmem:[%s1 + $0x4] sm:$0xf]
      %v639 = vld [vmem:[%s1 + $0x8] sm:$0xf]
      %v640 = vld [vmem:[%s1 + $0xc] sm:$0xf]
      %v641 = vld [vmem:[%s1 + $0x10] sm:$0xf]
      %v642 = vld [vmem:[%s1 + $0x14] sm:$0xf]
      %v643 = vld [vmem:[%s1 + $0x18] sm:$0xf]
      %v644 = vld [vmem:[%s1 + $0x1c] sm:$0xf]
      %v645 = vld [vmem:[%s1 + $0x20] sm:$0xf]
      %v646 = vld [vmem:[%s1 + $0x24] sm:$0xf]
      %v647 = vld [vmem:[%s1 + $0x28] sm:$0xf]
      %v648 = vld [vmem:[%s1 + $0x2c] sm:$0xf]
      %v649 = vld [vmem:[%s1 + $0x30] sm:$0xf]
      %v650 = vld [vmem:[%s1 + $0x34] sm:$0xf]
      %v651 = vld [vmem:[%s1 + $0x38] sm:$0xf]
      %v652 = vld [vmem:[%s1 + $0x3c] sm:$0xf]
      %v653 = vld [vmem:[%s1 + $0x40] sm:$0xf]
      %v654 = vld [vmem:[%s1 + $0x44] sm:$0xf]
      %v655 = vld [vmem:[%s1 + $0x48] sm:$0xf]
      %v656 = vld [vmem:[%s1 + $0x4c] sm:$0xf]
      %v657 = vld [vmem:[%s1 + $0x50] sm:$0xf]
      %v658 = vld [vmem:[%s1 + $0x54] sm:$0xf]
      %v659 = vld [vmem:[%s1 + $0x58] sm:$0xf]
      %v660 = vld [vmem:[%s1 + $0x5c] sm:$0xf]
      %v661 = vld [vmem:[%s1 + $0x60] sm:$0xf]
      %v662 = vld [vmem:[%s1 + $0x64] sm:$0xf]
      %v663 = vld [vmem:[%s1 + $0x68] sm:$0xf]
      %v664 = vld [vmem:[%s1 + $0x6c] sm:$0xf]
      %v665 = vld [vmem:[%s1 + $0x70] sm:$0xf]
      %v666 = vld [vmem:[%s1 + $0x74] sm:$0xf]
      %v667 = vld [vmem:[%s1 + $0x78] sm:$0xf]
      %v668 = vld [vmem:[%s1 + $0x7c] sm:$0xf]
      %v669 = vld [vmem:[%s1 + $0x80] sm:$0xf]
      %v670 = vld [vmem:[%s1 + $0x84] sm:$0xf]
      %v671 = vld [vmem:[%s1 + $0x88] sm:$0xf]
      %v672 = vld [vmem:[%s1 + $0x8c] sm:$0xf]
      %v673 = vld [vmem:[%s1 + $0x90] sm:$0xf]
      %v674 = vld [vmem:[%s1 + $0x94] sm:$0xf]
      %v675 = vld [vmem:[%s1 + $0x98] sm:$0xf]
      %v676 = vld [vmem:[%s1 + $0x9c] sm:$0xf]
      %v677 = vld [vmem:[%s1 + $0xa0] sm:$0xf]
      %v678 = vld [vmem:[%s1 + $0xa4] sm:$0xf]
      %v679 = vld [vmem:[%s1 + $0xa8] sm:$0xf]
      %v680 = vld [vmem:[%s1 + $0xac] sm:$0xf]
      %v681 = vld [vmem:[%s1 + $0xb0] sm:$0xf]
      %v682 = vld [vmem:[%s1 + $0xb4] sm:$0xf]
      %v683 = vld [vmem:[%s1 + $0xb8] sm:$0xf]
      %v684 = vld [vmem:[%s1 + $0xbc] sm:$0xf]
      %v685 = vld [vmem:[%s1 + $0xc0] sm:$0xf]
      %v686 = vld [vmem:[%s1 + $0xc4] sm:$0xf]
      %v687 = vld [vmem:[%s1 + $0xc8] sm:$0xf]
      %v688 = vld [vmem:[%s1 + $0xcc] sm:$0xf]
      %v689 = vld [vmem:[%s1 + $0xd0] sm:$0xf]
      %v690 = vld [vmem:[%s1 + $0xd4] sm:$0xf]
      %v691 = vld [vmem:[%s1 + $0xd8] sm:$0xf]
      %v692 = vld [vmem:[%s1 + $0xdc] sm:$0xf]
      %v693 = vld [vmem:[%s1 + $0xe0] sm:$0xf]
      %v694 = vld [vmem:[%s1 + $0xe4] sm:$0xf]
      %v695 = vld [vmem:[%s1 + $0xe8] sm:$0xf]
      %v696 = vld [vmem:[%s1 + $0xec] sm:$0xf]
      %v697 = vld [vmem:[%s1 + $0xf0] sm:$0xf]
      %v698 = vld [vmem:[%s1 + $0xf4] sm:$0xf]
      %v699 = vld [vmem:[%s1 + $0xf8] sm:$0xf]
      %v700 = vld [vmem:[%s1 + $0xfc] sm:$0xf]
      %v701 = vld [vmem:[%s1 + $0x100] sm:$0xf]
      %v702 = vld [vmem:[%s1 + $0x104] sm:$0xf]
      %v703 = vld [vmem:[%s1 + $0x108] sm:$0xf]
      %v704 = vld [vmem:[%s1 + $0x10c] sm:$0xf]
      %v705 = vld [vmem:[%s1 + $0x110] sm:$0xf]
      %v706 = vld [vmem:[%s1 + $0x114] sm:$0xf]
      %v707 = vld [vmem:[%s1 + $0x118] sm:$0xf]
      %v708 = vld [vmem:[%s1 + $0x11c] sm:$0xf]
      %v709 = vld [vmem:[%s1 + $0x120] sm:$0xf]
      %v710 = vld [vmem:[%s1 + $0x124] sm:$0xf]
      %v711 = vld [vmem:[%s1 + $0x128] sm:$0xf]
      %v712 = vld [vmem:[%s1 + $0x12c] sm:$0xf]
      %v713 = vld [vmem:[%s1 + $0x130] sm:$0xf]
      %v714 = vld [vmem:[%s1 + $0x134] sm:$0xf]
      %v715 = vld [vmem:[%s1 + $0x138] sm:$0xf]
      %v716 = vld [vmem:[%s1 + $0x13c] sm:$0xf]
      %v717 = vld [vmem:[%s1 + $0x140] sm:$0xf]
      %v718 = vld [vmem:[%s1 + $0x144] sm:$0xf]
      %v719 = vld [vmem:[%s1 + $0x148] sm:$0xf]
      %v720 = vld [vmem:[%s1 + $0x14c] sm:$0xf]
      %v721 = vld [vmem:[%s1 + $0x150] sm:$0xf]
      %v722 = vld [vmem:[%s1 + $0x154] sm:$0xf]
      %v723 = vld [vmem:[%s1 + $0x158] sm:$0xf]
      %v724 = vld [vmem:[%s1 + $0x15c] sm:$0xf]
      %v725 = vld [vmem:[%s1 + $0x160] sm:$0xf]
      %v726 = vld [vmem:[%s1 + $0x164] sm:$0xf]
      %v727 = vld [vmem:[%s1 + $0x168] sm:$0xf]
      %v728 = vld [vmem:[%s1 + $0x16c] sm:$0xf]
      %v729 = vld [vmem:[%s1 + $0x170] sm:$0xf]
      %v730 = vld [vmem:[%s1 + $0x174] sm:$0xf]
      %v731 = vld [vmem:[%s1 + $0x178] sm:$0xf]
      %v732 = vld [vmem:[%s1 + $0x17c] sm:$0xf]
      %v733 = vld [vmem:[%s1 + $0x180] sm:$0xf]
      %v734 = vld [vmem:[%s1 + $0x184] sm:$0xf]
      %v735 = vld [vmem:[%s1 + $0x188] sm:$0xf]
      %v736 = vld [vmem:[%s1 + $0x18c] sm:$0xf]
      %v737 = vld [vmem:[%s1 + $0x190] sm:$0xf]
      %v738 = vld [vmem:[%s1 + $0x194] sm:$0xf]
      %v739 = vld [vmem:[%s1 + $0x198] sm:$0xf]
      %v740 = vld [vmem:[%s1 + $0x19c] sm:$0xf]
      %v741 = vld [vmem:[%s1 + $0x1a0] sm:$0xf]
      %v742 = vld [vmem:[%s1 + $0x1a4] sm:$0xf]
      %v743 = vld [vmem:[%s1 + $0x1a8] sm:$0xf]
      %v744 = vld [vmem:[%s1 + $0x1ac] sm:$0xf]
      %v745 = vld [vmem:[%s1 + $0x1b0] sm:$0xf]
      %v746 = vld [vmem:[%s1 + $0x1b4] sm:$0xf]
      %v747 = vld [vmem:[%s1 + $0x1b8] sm:$0xf]
      %v748 = vld [vmem:[%s1 + $0x1bc] sm:$0xf]
      %v749 = vld [vmem:[%s1 + $0x1c0] sm:$0xf]
      %v750 = vld [vmem:[%s1 + $0x1c4] sm:$0xf]
      %v751 = vld [vmem:[%s1 + $0x1c8] sm:$0xf]
      %v752 = vld [vmem:[%s1 + $0x1cc] sm:$0xf]
      %v753 = vld [vmem:[%s1 + $0x1d0] sm:$0xf]
      %v754 = vld [vmem:[%s1 + $0x1d4] sm:$0xf]
      %v755 = vld [vmem:[%s1 + $0x1d8] sm:$0xf]
      %v756 = vld [vmem:[%s1 + $0x1dc] sm:$0xf]
      %v757 = vld [vmem:[%s1 + $0x1e0] sm:$0xf]
      %v758 = vld [vmem:[%s1 + $0x1e4] sm:$0xf]
      %v759 = vld [vmem:[%s1 + $0x1e8] sm:$0xf]
      %v760 = vld [vmem:[%s1 + $0x1ec] sm:$0xf]
      %v761 = vld [vmem:[%s1 + $0x1f0] sm:$0xf]
      %v762 = vld [vmem:[%s1 + $0x1f4] sm:$0xf]
      %v763 = vld [vmem:[%s1 + $0x1f8] sm:$0xf]
      %v764 = vld [vmem:[%s1 + $0x1fc] sm:$0xf]
      %v765 = vld [vmem:[%s1 + $0x200] sm:$0xf]
      %v766 = vld [vmem:[%s1 + $0x204] sm:$0xf]
      %v767 = vld [vmem:[%s1 + $0x208] sm:$0xf]
      %v768 = vld [vmem:[%s1 + $0x20c] sm:$0xf]
      %v769 = vld [vmem:[%s1 + $0x210] sm:$0xf]
      %v770 = vld [vmem:[%s1 + $0x214] sm:$0xf]
      %v771 = vld [vmem:[%s1 + $0x218] sm:$0xf]
      %v772 = vld [vmem:[%s1 + $0x21c] sm:$0xf]
      %v773 = vld [vmem:[%s1 + $0x220] sm:$0xf]
      %v774 = vld [vmem:[%s1 + $0x224] sm:$0xf]
      %v775 = vld [vmem:[%s1 + $0x228] sm:$0xf]
      %v776 = vld [vmem:[%s1 + $0x22c] sm:$0xf]
      %v777 = vld [vmem:[%s1 + $0x230] sm:$0xf]
      %v778 = vld [vmem:[%s1 + $0x234] sm:$0xf]
      %v779 = vld [vmem:[%s1 + $0x238] sm:$0xf]
      %v780 = vld [vmem:[%s1 + $0x23c] sm:$0xf]
      %v781 = vld [vmem:[%s2] sm:$0x1]
      %v783 = vlaneseq
      %v784 = vshrl.u32 %v783, 7
      %v785 = vsub.s32 0, %v784
      %v786 = vrot.slane %v781, %v785
      %v932 = vunpack.c.l.b16 %v637
      %v933 = vunpack.c.l.b16 %v638
      %v934 = vunpack.c.l.b16 %v639
      %v935 = vunpack.c.l.b16 %v640
      %v936 = vunpack.c.l.b16 %v641
      %v937 = vunpack.c.l.b16 %v642
      %v938 = vunpack.c.l.b16 %v643
      %v939 = vunpack.c.l.b16 %v644
      %v940 = vunpack.c.l.b16 %v645
      %v941 = vunpack.c.l.b16 %v646
      %v942 = vunpack.c.l.b16 %v647
      %v943 = vunpack.c.l.b16 %v648
      %v944 = vunpack.c.l.b16 %v649
      %v945 = vunpack.c.l.b16 %v650
      %v946 = vunpack.c.l.b16 %v651
      %v947 = vunpack.c.l.b16 %v652
      %v948 = vunpack.c.l.b16 %v653
      %v949 = vunpack.c.l.b16 %v654
      %v950 = vunpack.c.l.b16 %v655
      %v951 = vunpack.c.l.b16 %v656
      %v952 = vunpack.c.l.b16 %v657
      %v953 = vunpack.c.l.b16 %v658
      %v954 = vunpack.c.l.b16 %v659
      %v955 = vunpack.c.l.b16 %v660
      %v956 = vunpack.c.l.b16 %v661
      %v957 = vunpack.c.l.b16 %v662
      %v958 = vunpack.c.l.b16 %v663
      %v959 = vunpack.c.l.b16 %v664
      %v960 = vunpack.c.l.b16 %v665
      %v961 = vunpack.c.l.b16 %v666
      %v962 = vunpack.c.l.b16 %v667
      %v963 = vunpack.c.l.b16 %v668
      %v964 = vunpack.c.l.b16 %v669
      %v965 = vunpack.c.l.b16 %v670
      %v966 = vunpack.c.l.b16 %v671
      %v967 = vunpack.c.l.b16 %v672
      %v968 = vunpack.c.l.b16 %v673
      %v969 = vunpack.c.l.b16 %v674
      %v970 = vunpack.c.l.b16 %v675
      %v971 = vunpack.c.l.b16 %v676
      %v972 = vunpack.c.l.b16 %v677
      %v973 = vunpack.c.l.b16 %v678
      %v974 = vunpack.c.l.b16 %v679
      %v975 = vunpack.c.l.b16 %v680
      %v976 = vunpack.c.l.b16 %v681
      %v977 = vunpack.c.l.b16 %v682
      %v978 = vunpack.c.l.b16 %v683
      %v979 = vunpack.c.l.b16 %v684
      %v980 = vunpack.c.l.b16 %v685
      %v981 = vunpack.c.l.b16 %v686
      %v982 = vunpack.c.l.b16 %v687
      %v983 = vunpack.c.l.b16 %v688
      %v984 = vunpack.c.l.b16 %v689
      %v985 = vunpack.c.l.b16 %v690
      %v986 = vunpack.c.l.b16 %v691
      %v987 = vunpack.c.l.b16 %v692
      %v988 = vunpack.c.l.b16 %v693
      %v989 = vunpack.c.l.b16 %v694
      %v990 = vunpack.c.l.b16 %v695
      %v991 = vunpack.c.l.b16 %v696
      %v992 = vunpack.c.l.b16 %v697
      %v993 = vunpack.c.l.b16 %v698
      %v994 = vunpack.c.l.b16 %v699
      %v995 = vunpack.c.l.b16 %v700
      %v996 = vunpack.c.l.b16 %v701
      %v997 = vunpack.c.l.b16 %v702
      %v998 = vunpack.c.l.b16 %v703
      %v999 = vunpack.c.l.b16 %v704
      %v1000 = vunpack.c.l.b16 %v705
      %v1001 = vunpack.c.l.b16 %v706
      %v1002 = vunpack.c.l.b16 %v707
      %v1003 = vunpack.c.l.b16 %v708
      %v1004 = vunpack.c.l.b16 %v709
      %v1005 = vunpack.c.l.b16 %v710
      %v1006 = vunpack.c.l.b16 %v711
      %v1007 = vunpack.c.l.b16 %v712
      %v1008 = vunpack.c.l.b16 %v713
      %v1009 = vunpack.c.l.b16 %v714
      %v1010 = vunpack.c.l.b16 %v715
      %v1011 = vunpack.c.l.b16 %v716
      %v1012 = vunpack.c.l.b16 %v717
      %v1013 = vunpack.c.l.b16 %v718
      %v1014 = vunpack.c.l.b16 %v719
      %v1015 = vunpack.c.l.b16 %v720
      %v1016 = vunpack.c.l.b16 %v721
      %v1017 = vunpack.c.l.b16 %v722
      %v1018 = vunpack.c.l.b16 %v723
      %v1019 = vunpack.c.l.b16 %v724
      %v1020 = vunpack.c.l.b16 %v725
      %v1021 = vunpack.c.l.b16 %v726
      %v1022 = vunpack.c.l.b16 %v727
      %v1023 = vunpack.c.l.b16 %v728
      %v1024 = vunpack.c.l.b16 %v729
      %v1025 = vunpack.c.l.b16 %v730
      %v1026 = vunpack.c.l.b16 %v731
      %v1027 = vunpack.c.l.b16 %v732
      %v1028 = vunpack.c.l.b16 %v733
      %v1029 = vunpack.c.l.b16 %v734
      %v1030 = vunpack.c.l.b16 %v735
      %v1031 = vunpack.c.l.b16 %v736
      %v1032 = vunpack.c.l.b16 %v737
      %v1033 = vunpack.c.l.b16 %v738
      %v1034 = vunpack.c.l.b16 %v739
      %v1035 = vunpack.c.l.b16 %v740
      %v1036 = vunpack.c.l.b16 %v741
      %v1037 = vunpack.c.l.b16 %v742
      %v1038 = vunpack.c.l.b16 %v743
      %v1039 = vunpack.c.l.b16 %v744
      %v1040 = vunpack.c.l.b16 %v745
      %v1041 = vunpack.c.l.b16 %v746
      %v1042 = vunpack.c.l.b16 %v747
      %v1043 = vunpack.c.l.b16 %v748
      %v1044 = vunpack.c.l.b16 %v749
      %v1045 = vunpack.c.l.b16 %v750
      %v1046 = vunpack.c.l.b16 %v751
      %v1047 = vunpack.c.l.b16 %v752
      %v1048 = vunpack.c.l.b16 %v753
      %v1049 = vunpack.c.l.b16 %v754
      %v1050 = vunpack.c.l.b16 %v755
      %v1051 = vunpack.c.l.b16 %v756
      %v1052 = vunpack.c.l.b16 %v757
      %v1053 = vunpack.c.l.b16 %v758
      %v1054 = vunpack.c.l.b16 %v759
      %v1055 = vunpack.c.l.b16 %v760
      %v1056 = vunpack.c.l.b16 %v761
      %v1057 = vunpack.c.l.b16 %v762
      %v1058 = vunpack.c.l.b16 %v763
      %v1059 = vunpack.c.l.b16 %v764
      %v1060 = vunpack.c.l.b16 %v765
      %v1061 = vunpack.c.l.b16 %v766
      %v1062 = vunpack.c.l.b16 %v767
      %v1063 = vunpack.c.l.b16 %v768
      %v1064 = vunpack.c.l.b16 %v769
      %v1065 = vunpack.c.l.b16 %v770
      %v1066 = vunpack.c.l.b16 %v771
      %v1067 = vunpack.c.l.b16 %v772
      %v1068 = vunpack.c.l.b16 %v773
      %v1069 = vunpack.c.l.b16 %v774
      %v1070 = vunpack.c.l.b16 %v775
      %v1071 = vunpack.c.l.b16 %v776
      %v1072 = vunpack.c.l.b16 %v777
      %v1073 = vunpack.c.l.b16 %v778
      %v1074 = vunpack.c.l.b16 %v779
      %v1075 = vunpack.c.l.b16 %v780
      %v1076 = vpack.c.b16 %v933, %v932
      %v1077 = vpack.c.b16 %v935, %v934
      %v1078 = vpack.c.b16 %v937, %v936
      %v1079 = vpack.c.b16 %v939, %v938
      %v1080 = vpack.c.b16 %v941, %v940
      %v1081 = vpack.c.b16 %v943, %v942
      %v1082 = vpack.c.b16 %v945, %v944
      %v1083 = vpack.c.b16 %v947, %v946
      %v1084 = vpack.c.b16 %v949, %v948
      %v1085 = vpack.c.b16 %v951, %v950
      %v1086 = vpack.c.b16 %v953, %v952
      %v1087 = vpack.c.b16 %v955, %v954
      %v1088 = vpack.c.b16 %v957, %v956
      %v1089 = vpack.c.b16 %v959, %v958
      %v1090 = vpack.c.b16 %v961, %v960
      %v1091 = vpack.c.b16 %v963, %v962
      %v1092 = vpack.c.b16 %v965, %v964
      %v1093 = vpack.c.b16 %v967, %v966
      %v1094 = vpack.c.b16 %v969, %v968
      %v1095 = vpack.c.b16 %v971, %v970
      %v1096 = vpack.c.b16 %v973, %v972
      %v1097 = vpack.c.b16 %v975, %v974
      %v1098 = vpack.c.b16 %v977, %v976
      %v1099 = vpack.c.b16 %v979, %v978
      %v1100 = vpack.c.b16 %v981, %v980
      %v1101 = vpack.c.b16 %v983, %v982
      %v1102 = vpack.c.b16 %v985, %v984
      %v1103 = vpack.c.b16 %v987, %v986
      %v1104 = vpack.c.b16 %v989, %v988
      %v1105 = vpack.c.b16 %v991, %v990
      %v1106 = vpack.c.b16 %v993, %v992
      %v1107 = vpack.c.b16 %v995, %v994
      %v1108 = vpack.c.b16 %v997, %v996
      %v1109 = vpack.c.b16 %v999, %v998
      %v1110 = vpack.c.b16 %v1001, %v1000
      %v1111 = vpack.c.b16 %v1003, %v1002
      %v1112 = vpack.c.b16 %v1005, %v1004
      %v1113 = vpack.c.b16 %v1007, %v1006
      %v1114 = vpack.c.b16 %v1009, %v1008
      %v1115 = vpack.c.b16 %v1011, %v1010
      %v1116 = vpack.c.b16 %v1013, %v1012
      %v1117 = vpack.c.b16 %v1015, %v1014
      %v1118 = vpack.c.b16 %v1017, %v1016
      %v1119 = vpack.c.b16 %v1019, %v1018
      %v1120 = vpack.c.b16 %v1021, %v1020
      %v1121 = vpack.c.b16 %v1023, %v1022
      %v1122 = vpack.c.b16 %v1025, %v1024
      %v1123 = vpack.c.b16 %v1027, %v1026
      %v1124 = vpack.c.b16 %v1029, %v1028
      %v1125 = vpack.c.b16 %v1031, %v1030
      %v1126 = vpack.c.b16 %v1033, %v1032
      %v1127 = vpack.c.b16 %v1035, %v1034
      %v1128 = vpack.c.b16 %v1037, %v1036
      %v1129 = vpack.c.b16 %v1039, %v1038
      %v1130 = vpack.c.b16 %v1041, %v1040
      %v1131 = vpack.c.b16 %v1043, %v1042
      %v1132 = vpack.c.b16 %v1045, %v1044
      %v1133 = vpack.c.b16 %v1047, %v1046
      %v1134 = vpack.c.b16 %v1049, %v1048
      %v1135 = vpack.c.b16 %v1051, %v1050
      %v1136 = vpack.c.b16 %v1053, %v1052
      %v1137 = vpack.c.b16 %v1055, %v1054
      %v1138 = vpack.c.b16 %v1057, %v1056
      %v1139 = vpack.c.b16 %v1059, %v1058
      %v1140 = vpack.c.b16 %v1061, %v1060
      %v1141 = vpack.c.b16 %v1063, %v1062
      %v1142 = vpack.c.b16 %v1065, %v1064
      %v1143 = vpack.c.b16 %v1067, %v1066
      %v1144 = vpack.c.b16 %v1069, %v1068
      %v1145 = vpack.c.b16 %v1071, %v1070
      %v1146 = vpack.c.b16 %v1073, %v1072
      %v1147 = vpack.c.b16 %v1075, %v1074
      %1220 = vmatprep.subr.bf16.mxu0 0
      %1221 = vmatpush1.bf16.msra.mxu0 %v1076
      %1222 = vmatprep.subr.bf16.mxu0 0
      %1223 = vmatpush1.bf16.msra.mxu0 %v1077
      %1224 = vmatprep.subr.bf16.mxu0 0
      %1225 = vmatpush1.bf16.msra.mxu0 %v1078
      %1226 = vmatprep.subr.bf16.mxu0 0
      %1227 = vmatpush1.bf16.msra.mxu0 %v1079
      %1228 = vmatprep.subr.bf16.mxu0 0
      %1229 = vmatpush1.bf16.msra.mxu0 %v1080
      %1230 = vmatprep.subr.bf16.mxu0 0
      %1231 = vmatpush1.bf16.msra.mxu0 %v1081
      %1232 = vmatprep.subr.bf16.mxu0 0
      %1233 = vmatpush1.bf16.msra.mxu0 %v1082
      %1234 = vmatprep.subr.bf16.mxu0 0
      %1235 = vmatpush1.bf16.msra.mxu0 %v1083
      %1236 = vmatprep.subr.bf16.mxu0 0
      %1237 = vmatpush1.bf16.msra.mxu0 %v1084
      %1238 = vmatprep.subr.bf16.mxu0 0
      %1239 = vmatpush1.bf16.msra.mxu0 %v1085
      %1240 = vmatprep.subr.bf16.mxu0 0
      %1241 = vmatpush1.bf16.msra.mxu0 %v1086
      %1242 = vmatprep.subr.bf16.mxu0 0
      %1243 = vmatpush1.bf16.msra.mxu0 %v1087
      %1244 = vmatprep.subr.bf16.mxu0 0
      %1245 = vmatpush1.bf16.msra.mxu0 %v1088
      %1246 = vmatprep.subr.bf16.mxu0 0
      %1247 = vmatpush1.bf16.msra.mxu0 %v1089
      %1248 = vmatprep.subr.bf16.mxu0 0
      %1249 = vmatpush1.bf16.msra.mxu0 %v1090
      %1250 = vmatprep.subr.bf16.mxu0 0
      %1251 = vmatpush1.bf16.msra.mxu0 %v1091
      %1252 = vmatprep.mubr.bf16.mxu0 %v419
      %1253 = vmatmul.mubr.bf16.gmra.mrb[0].mxu0 %v383
      %v1254 = vpop.f32.mrb[0].mxu0
      %v1255 = vadd.f32 %v786, %v1254
      %v1256 = vpop.f32.mrb[0].mxu0
      %v1257 = vpop.f32.mrb[0].mxu0
      %v1258 = vadd.f32 %v786, %v1257
      %v1259 = vpop.f32.mrb[0].mxu0
      %1260 = vmatprep.mubr.bf16.mxu0 %v431
      %1261 = vmatmul.mubr.bf16.gmra.mrb[0].mxu0 %v385
      %v1262 = vpop.f32.mrb[0].mxu0
      %v1263 = vadd.f32 %v786, %v1262
      %v1264 = vpop.f32.mrb[0].mxu0
      %v1265 = vpop.f32.mrb[0].mxu0
      %v1266 = vadd.f32 %v786, %v1265
      %v1267 = vpop.f32.mrb[0].mxu0
      %1268 = vmatprep.mubr.bf16.mxu0 %v443
      %1269 = vmatmul.mubr.bf16.gmra.mrb[0].mxu0 %v387
      %v1270 = vpop.f32.mrb[0].mxu0
      %v1271 = vadd.f32 %v786, %v1270
      %v1272 = vpop.f32.mrb[0].mxu0
      %v1273 = vpop.f32.mrb[0].mxu0
      %v1274 = vadd.f32 %v786, %v1273
      %v1275 = vpop.f32.mrb[0].mxu0
      %1276 = vmatprep.mubr.bf16.mxu0 %v455
      %1277 = vmatmul.mubr.bf16.gmra.mrb[0].mxu0 %v389
      %v1278 = vpop.f32.mrb[0].mxu0
      %v1279 = vadd.f32 %v786, %v1278
      %v1280 = vpop.f32.mrb[0].mxu0
      %v1281 = vpop.f32.mrb[0].mxu0
      %v1282 = vadd.f32 %v786, %v1281
      %v1283 = vpop.f32.mrb[0].mxu0
      %1284 = vmatprep.mubr.bf16.mxu0 %v467
      %1285 = vmatmul.mubr.bf16.gmra.mrb[0].mxu0 %v391
      %v1286 = vpop.f32.mrb[0].mxu0
      %v1287 = vadd.f32 %v786, %v1286
      %v1288 = vpop.f32.mrb[0].mxu0
      %v1289 = vpop.f32.mrb[0].mxu0
      %v1290 = vadd.f32 %v786, %v1289
      %v1291 = vpop.f32.mrb[0].mxu0
      %1292 = vmatprep.mubr.bf16.mxu0 %v479
      %1293 = vmatmul.mubr.bf16.gmra.mrb[0].mxu0 %v393
      %v1294 = vpop.f32.mrb[0].mxu0
      %v1295 = vadd.f32 %v786, %v1294
      %v1296 = vpop.f32.mrb[0].mxu0
      %v1297 = vpop.f32.mrb[0].mxu0
      %v1298 = vadd.f32 %v786, %v1297
      %v1299 = vpop.f32.mrb[0].mxu0
      %1300 = vmatprep.mubr.bf16.mxu0 %v491
      %1301 = vmatmul.mubr.bf16.gmra.mrb[0].mxu0 %v395
      %v1302 = vpop.f32.mrb[0].mxu0
      %v1303 = vadd.f32 %v786, %v1302
      %v1304 = vpop.f32.mrb[0].mxu0
      %v1305 = vpop.f32.mrb[0].mxu0
      %v1306 = vadd.f32 %v786, %v1305
      %v1307 = vpop.f32.mrb[0].mxu0
      %1308 = vmatprep.mubr.bf16.mxu0 %v503
      %1309 = vmatmul.mubr.bf16.gmra.mrb[0].mxu0 %v397
      %v1310 = vpop.f32.mrb[0].mxu0
      %v1311 = vadd.f32 %v786, %v1310
      %v1312 = vpop.f32.mrb[0].mxu0
      %v1313 = vpop.f32.mrb[0].mxu0
      %v1314 = vadd.f32 %v786, %v1313
      %v1315 = vpop.f32.mrb[0].mxu0
      %1316 = vmatprep.mubr.bf16.mxu0 %v515
      %1317 = vmatmul.mubr.bf16.gmra.mrb[0].mxu0 %v399
      %v1318 = vpop.f32.mrb[0].mxu0
      %v1319 = vadd.f32 %v786, %v1318
      %v1320 = vpop.f32.mrb[0].mxu0
      %v1321 = vpop.f32.mrb[0].mxu0
      %v1322 = vadd.f32 %v786, %v1321
      %v1323 = vpop.f32.mrb[0].mxu0
      %1324 = vmatprep.mubr.bf16.mxu0 %v527
      %1325 = vmatmul.mubr.bf16.gmra.mrb[0].mxu0 %v401
      %v1326 = vpop.f32.mrb[0].mxu0
      %v1327 = vadd.f32 %v786, %v1326
      %v1328 = vpop.f32.mrb[0].mxu0
      %v1329 = vpop.f32.mrb[0].mxu0
      %v1330 = vadd.f32 %v786, %v1329
      %v1331 = vpop.f32.mrb[0].mxu0
      %1332 = vdwg.mxu0
      %1333 = vmatprep.subr.bf16.mxu0 0
      %1334 = vmatpush1.bf16.msra.mxu0 %v1092
      %1335 = vmatprep.subr.bf16.mxu0 0
      %1336 = vmatpush1.bf16.msra.mxu0 %v1093
      %1337 = vmatprep.subr.bf16.mxu0 0
      %1338 = vmatpush1.bf16.msra.mxu0 %v1094
      %1339 = vmatprep.subr.bf16.mxu0 0
      %1340 = vmatpush1.bf16.msra.mxu0 %v1095
      %1341 = vmatprep.subr.bf16.mxu0 0
      %1342 = vmatpush1.bf16.msra.mxu0 %v1096
      %1343 = vmatprep.subr.bf16.mxu0 0
      %1344 = vmatpush1.bf16.msra.mxu0 %v1097
      %1345 = vmatprep.subr.bf16.mxu0 0
      %1346 = vmatpush1.bf16.msra.mxu0 %v1098
      %1347 = vmatprep.subr.bf16.mxu0 0
      %1348 = vmatpush1.bf16.msra.mxu0 %v1099
      %1349 = vmatprep.subr.bf16.mxu0 0
      %1350 = vmatpush1.bf16.msra.mxu0 %v1100
      %1351 = vmatprep.subr.bf16.mxu0 0
      %1352 = vmatpush1.bf16.msra.mxu0 %v1101
      %1353 = vmatprep.subr.bf16.mxu0 0
      %1354 = vmatpush1.bf16.msra.mxu0 %v1102
      %1355 = vmatprep.subr.bf16.mxu0 0
      %1356 = vmatpush1.bf16.msra.mxu0 %v1103
      %1357 = vmatprep.subr.bf16.mxu0 0
      %1358 = vmatpush1.bf16.msra.mxu0 %v1104
      %1359 = vmatprep.subr.bf16.mxu0 0
      %1360 = vmatpush1.bf16.msra.mxu0 %v1105
      %1361 = vmatprep.subr.bf16.mxu0 0
      %1362 = vmatpush1.bf16.msra.mxu0 %v1106
      %1363 = vmatprep.subr.bf16.mxu0 0
      %1364 = vmatpush1.bf16.msra.mxu0 %v1107
      %1365 = vmatprep.mubr.bf16.mxu0 %v385
      %1366 = vmatmul.mubr.bf16.gmra.mrb[0].mxu0 %v561
      %v1367 = vpop.f32.mrb[0].mxu0
      %v1368 = vadd.f32 %v1255, %v1367
      %v1369 = vpop.f32.mrb[0].mxu0
      %v1370 = vpop.f32.mrb[0].mxu0
      %v1371 = vadd.f32 %v1258, %v1370
      %v1372 = vpop.f32.mrb[0].mxu0
      %1373 = vmatprep.mubr.bf16.mxu0 %v387
      %1374 = vmatmul.mubr.bf16.gmra.mrb[0].mxu0 %v564
      %v1375 = vpop.f32.mrb[0].mxu0
      %v1376 = vadd.f32 %v1263, %v1375
      %v1377 = vpop.f32.mrb[0].mxu0
      %v1378 = vpop.f32.mrb[0].mxu0
      %v1379 = vadd.f32 %v1266, %v1378
      %v1380 = vpop.f32.mrb[0].mxu0
      %1381 = vmatprep.mubr.bf16.mxu0 %v389
      %1382 = vmatmul.mubr.bf16.gmra.mrb[0].mxu0 %v567
      %v1383 = vpop.f32.mrb[0].mxu0
      %v1384 = vadd.f32 %v1271, %v1383
      %v1385 = vpop.f32.mrb[0].mxu0
      %v1386 = vpop.f32.mrb[0].mxu0
      %v1387 = vadd.f32 %v1274, %v1386
      %v1388 = vpop.f32.mrb[0].mxu0
      %1389 = vmatprep.mubr.bf16.mxu0 %v391
      %1390 = vmatmul.mubr.bf16.gmra.mrb[0].mxu0 %v570
      %v1391 = vpop.f32.mrb[0].mxu0
      %v1392 = vadd.f32 %v1279, %v1391
      %v1393 = vpop.f32.mrb[0].mxu0
      %v1394 = vpop.f32.mrb[0].mxu0
      %v1395 = vadd.f32 %v1282, %v1394
      %v1396 = vpop.f32.mrb[0].mxu0
      %1397 = vmatprep.mubr.bf16.mxu0 %v393
      %1398 = vmatmul.mubr.bf16.gmra.mrb[0].mxu0 %v573
      %v1399 = vpop.f32.mrb[0].mxu0
      %v1400 = vadd.f32 %v1287, %v1399
      %v1401 = vpop.f32.mrb[0].mxu0
      %v1402 = vpop.f32.mrb[0].mxu0
      %v1403 = vadd.f32 %v1290, %v1402
      %v1404 = vpop.f32.mrb[0].mxu0
      %1405 = vmatprep.mubr.bf16.mxu0 %v395
      %1406 = vmatmul.mubr.bf16.gmra.mrb[0].mxu0 %v576
      %v1407 = vpop.f32.mrb[0].mxu0
      %v1408 = vadd.f32 %v1295, %v1407
      %v1409 = vpop.f32.mrb[0].mxu0
      %v1410 = vpop.f32.mrb[0].mxu0
      %v1411 = vadd.f32 %v1298, %v1410
      %v1412 = vpop.f32.mrb[0].mxu0
      %1413 = vmatprep.mubr.bf16.mxu0 %v397
      %1414 = vmatmul.mubr.bf16.gmra.mrb[0].mxu0 %v579
      %v1415 = vpop.f32.mrb[0].mxu0
      %v1416 = vadd.f32 %v1303, %v1415
      %v1417 = vpop.f32.mrb[0].mxu0
      %v1418 = vpop.f32.mrb[0].mxu0
      %v1419 = vadd.f32 %v1306, %v1418
      %v1420 = vpop.f32.mrb[0].mxu0
      %1421 = vmatprep.mubr.bf16.mxu0 %v399
      %1422 = vmatmul.mubr.bf16.gmra.mrb[0].mxu0 %v582
      %v1423 = vpop.f32.mrb[0].mxu0
      %v1424 = vadd.f32 %v1311, %v1423
      %v1425 = vpop.f32.mrb[0].mxu0
      %v1426 = vpop.f32.mrb[0].mxu0
      %v1427 = vadd.f32 %v1314, %v1426
      %v1428 = vpop.f32.mrb[0].mxu0
      %1429 = vmatprep.mubr.bf16.mxu0 %v401
      %1430 = vmatmul.mubr.bf16.gmra.mrb[0].mxu0 %v585
      %v1431 = vpop.f32.mrb[0].mxu0
      %v1432 = vadd.f32 %v1319, %v1431
      %v1433 = vpop.f32.mrb[0].mxu0
      %v1434 = vpop.f32.mrb[0].mxu0
      %v1435 = vadd.f32 %v1322, %v1434
      %v1436 = vpop.f32.mrb[0].mxu0
      %1437 = vmatprep.mubr.bf16.mxu0 %v403
      %1438 = vmatmul.mubr.bf16.gmra.mrb[0].mxu0 %v588
      %v1439 = vpop.f32.mrb[0].mxu0
      %v1440 = vadd.f32 %v1327, %v1439
      %v1441 = vpop.f32.mrb[0].mxu0
      %v1442 = vpop.f32.mrb[0].mxu0
      %v1443 = vadd.f32 %v1330, %v1442
      %v1444 = vpop.f32.mrb[0].mxu0
      %1445 = vdwg.mxu0
      %1446 = vmatprep.subr.bf16.mxu0 0
      %1447 = vmatpush1.bf16.msra.mxu0 %v1108
      %1448 = vmatprep.subr.bf16.mxu0 0
      %1449 = vmatpush1.bf16.msra.mxu0 %v1109
      %1450 = vmatprep.subr.bf16.mxu0 0
      %1451 = vmatpush1.bf16.msra.mxu0 %v1110
      %1452 = vmatprep.subr.bf16.mxu0 0
      %1453 = vmatpush1.bf16.msra.mxu0 %v1111
      %1454 = vmatprep.subr.bf16.mxu0 0
      %1455 = vmatpush1.bf16.msra.mxu0 %v1112
      %1456 = vmatprep.subr.bf16.mxu0 0
      %1457 = vmatpush1.bf16.msra.mxu0 %v1113
      %1458 = vmatprep.subr.bf16.mxu0 0
      %1459 = vmatpush1.bf16.msra.mxu0 %v1114
      %1460 = vmatprep.subr.bf16.mxu0 0
      %1461 = vmatpush1.bf16.msra.mxu0 %v1115
      %1462 = vmatprep.subr.bf16.mxu0 0
      %1463 = vmatpush1.bf16.msra.mxu0 %v1116
      %1464 = vmatprep.subr.bf16.mxu0 0
      %1465 = vmatpush1.bf16.msra.mxu0 %v1117
      %1466 = vmatprep.subr.bf16.mxu0 0
      %1467 = vmatpush1.bf16.msra.mxu0 %v1118
      %1468 = vmatprep.subr.bf16.mxu0 0
      %1469 = vmatpush1.bf16.msra.mxu0 %v1119
      %1470 = vmatprep.subr.bf16.mxu0 0
      %1471 = vmatpush1.bf16.msra.mxu0 %v1120
      %1472 = vmatprep.subr.bf16.mxu0 0
      %1473 = vmatpush1.bf16.msra.mxu0 %v1121
      %1474 = vmatprep.subr.bf16.mxu0 0
      %1475 = vmatpush1.bf16.msra.mxu0 %v1122
      %1476 = vmatprep.subr.bf16.mxu0 0
      %1477 = vmatpush1.bf16.msra.mxu0 %v1123
      %1478 = vmatprep.mubr.bf16.mxu0 %v564
      %1479 = vmatmul.mubr.bf16.gmra.mrb[0].mxu0 %v431
      %v1480 = vpop.f32.mrb[0].mxu0
      %v1481 = vadd.f32 %v1368, %v1480
      %v1482 = vpop.f32.mrb[0].mxu0
      %v1483 = vpop.f32.mrb[0].mxu0
      %v1484 = vadd.f32 %v1371, %v1483
      %v1485 = vpop.f32.mrb[0].mxu0
      %1486 = vmatprep.mubr.bf16.mxu0 %v567
      %1487 = vmatmul.mubr.bf16.gmra.mrb[0].mxu0 %v443
      %v1488 = vpop.f32.mrb[0].mxu0
      %v1489 = vadd.f32 %v1376, %v1488
      %v1490 = vpop.f32.mrb[0].mxu0
      %v1491 = vpop.f32.mrb[0].mxu0
      %v1492 = vadd.f32 %v1379, %v1491
      %v1493 = vpop.f32.mrb[0].mxu0
      %1494 = vmatprep.mubr.bf16.mxu0 %v570
      %1495 = vmatmul.mubr.bf16.gmra.mrb[0].mxu0 %v455
      %v1496 = vpop.f32.mrb[0].mxu0
      %v1497 = vadd.f32 %v1384, %v1496
      %v1498 = vpop.f32.mrb[0].mxu0
      %v1499 = vpop.f32.mrb[0].mxu0
      %v1500 = vadd.f32 %v1387, %v1499
      %v1501 = vpop.f32.mrb[0].mxu0
      %1502 = vmatprep.mubr.bf16.mxu0 %v573
      %1503 = vmatmul.mubr.bf16.gmra.mrb[0].mxu0 %v467
      %v1504 = vpop.f32.mrb[0].mxu0
      %v1505 = vadd.f32 %v1392, %v1504
      %v1506 = vpop.f32.mrb[0].mxu0
      %v1507 = vpop.f32.mrb[0].mxu0
      %v1508 = vadd.f32 %v1395, %v1507
      %v1509 = vpop.f32.mrb[0].mxu0
      %1510 = vmatprep.mubr.bf16.mxu0 %v576
      %1511 = vmatmul.mubr.bf16.gmra.mrb[0].mxu0 %v479
      %v1512 = vpop.f32.mrb[0].mxu0
      %v1513 = vadd.f32 %v1400, %v1512
      %v1514 = vpop.f32.mrb[0].mxu0
      %v1515 = vpop.f32.mrb[0].mxu0
      %v1516 = vadd.f32 %v1403, %v1515
      %v1517 = vpop.f32.mrb[0].mxu0
      %1518 = vmatprep.mubr.bf16.mxu0 %v579
      %1519 = vmatmul.mubr.bf16.gmra.mrb[0].mxu0 %v491
      %v1520 = vpop.f32.mrb[0].mxu0
      %v1521 = vadd.f32 %v1408, %v1520
      %v1522 = vpop.f32.mrb[0].mxu0
      %v1523 = vpop.f32.mrb[0].mxu0
      %v1524 = vadd.f32 %v1411, %v1523
      %v1525 = vpop.f32.mrb[0].mxu0
      %1526 = vmatprep.mubr.bf16.mxu0 %v582
      %1527 = vmatmul.mubr.bf16.gmra.mrb[0].mxu0 %v503
      %v1528 = vpop.f32.mrb[0].mxu0
      %v1529 = vadd.f32 %v1416, %v1528
      %v1530 = vpop.f32.mrb[0].mxu0
      %v1531 = vpop.f32.mrb[0].mxu0
      %v1532 = vadd.f32 %v1419, %v1531
      %v1533 = vpop.f32.mrb[0].mxu0
      %1534 = vmatprep.mubr.bf16.mxu0 %v585
      %1535 = vmatmul.mubr.bf16.gmra.mrb[0].mxu0 %v515
      %v1536 = vpop.f32.mrb[0].mxu0
      %v1537 = vadd.f32 %v1424, %v1536
      %v1538 = vpop.f32.mrb[0].mxu0
      %v1539 = vpop.f32.mrb[0].mxu0
      %v1540 = vadd.f32 %v1427, %v1539
      %v1541 = vpop.f32.mrb[0].mxu0
      %1542 = vmatprep.mubr.bf16.mxu0 %v588
      %1543 = vmatmul.mubr.bf16.gmra.mrb[0].mxu0 %v527
      %v1544 = vpop.f32.mrb[0].mxu0
      %v1545 = vadd.f32 %v1432, %v1544
      %v1546 = vpop.f32.mrb[0].mxu0
      %v1547 = vpop.f32.mrb[0].mxu0
      %v1548 = vadd.f32 %v1435, %v1547
      %v1549 = vpop.f32.mrb[0].mxu0
      %1550 = vmatprep.mubr.bf16.mxu0 %v616
      %1551 = vmatmul.mubr.bf16.gmra.mrb[0].mxu0 %v610
      %v1552 = vpop.f32.mrb[0].mxu0
      %v1553 = vadd.f32 %v1440, %v1552
      %v1554 = vpop.f32.mrb[0].mxu0
      %v1555 = vpop.f32.mrb[0].mxu0
      %v1556 = vadd.f32 %v1443, %v1555
      %v1557 = vpop.f32.mrb[0].mxu0
      %1558 = vdwg.mxu0
      %1559 = vmatprep.subr.bf16.mxu0 0
      %1560 = vmatpush1.bf16.msra.mxu0 %v1124
      %1561 = vmatprep.subr.bf16.mxu0 0
      %1562 = vmatpush1.bf16.msra.mxu0 %v1125
      %1563 = vmatprep.subr.bf16.mxu0 0
      %1564 = vmatpush1.bf16.msra.mxu0 %v1126
      %1565 = vmatprep.subr.bf16.mxu0 0
      %1566 = vmatpush1.bf16.msra.mxu0 %v1127
      %1567 = vmatprep.subr.bf16.mxu0 0
      %1568 = vmatpush1.bf16.msra.mxu0 %v1128
      %1569 = vmatprep.subr.bf16.mxu0 0
      %1570 = vmatpush1.bf16.msra.mxu0 %v1129
      %1571 = vmatprep.subr.bf16.mxu0 0
      %1572 = vmatpush1.bf16.msra.mxu0 %v1130
      %1573 = vmatprep.subr.bf16.mxu0 0
      %1574 = vmatpush1.bf16.msra.mxu0 %v1131
      %1575 = vmatprep.subr.bf16.mxu0 0
      %1576 = vmatpush1.bf16.msra.mxu0 %v1132
      %1577 = vmatprep.subr.bf16.mxu0 0
      %1578 = vmatpush1.bf16.msra.mxu0 %v1133
      %1579 = vmatprep.subr.bf16.mxu0 0
      %1580 = vmatpush1.bf16.msra.mxu0 %v1134
      %1581 = vmatprep.subr.bf16.mxu0 0
      %1582 = vmatpush1.bf16.msra.mxu0 %v1135
      %1583 = vmatprep.subr.bf16.mxu0 0
      %1584 = vmatpush1.bf16.msra.mxu0 %v1136
      %1585 = vmatprep.subr.bf16.mxu0 0
      %1586 = vmatpush1.bf16.msra.mxu0 %v1137
      %1587 = vmatprep.subr.bf16.mxu0 0
      %1588 = vmatpush1.bf16.msra.mxu0 %v1138
      %1589 = vmatprep.subr.bf16.mxu0 0
      %1590 = vmatpush1.bf16.msra.mxu0 %v1139
      %1591 = vmatprep.mubr.bf16.mxu0 %v443
      %1592 = vmatmul.mubr.bf16.gmra.mrb[0].mxu0 %v387
      %v1593 = vpop.f32.mrb[0].mxu0
      %v1594 = vadd.f32 %v1481, %v1593
      %v1595 = vpop.f32.mrb[0].mxu0
      %v1596 = vpop.f32.mrb[0].mxu0
      %v1597 = vadd.f32 %v1484, %v1596
      %v1598 = vpop.f32.mrb[0].mxu0
      %1599 = vmatprep.mubr.bf16.mxu0 %v455
      %1600 = vmatmul.mubr.bf16.gmra.mrb[0].mxu0 %v389
      %v1601 = vpop.f32.mrb[0].mxu0
      %v1602 = vadd.f32 %v1489, %v1601
      %v1603 = vpop.f32.mrb[0].mxu0
      %v1604 = vpop.f32.mrb[0].mxu0
      %v1605 = vadd.f32 %v1492, %v1604
      %v1606 = vpop.f32.mrb[0].mxu0
      %1607 = vmatprep.mubr.bf16.mxu0 %v467
      %1608 = vmatmul.mubr.bf16.gmra.mrb[0].mxu0 %v391
      %v1609 = vpop.f32.mrb[0].mxu0
      %v1610 = vadd.f32 %v1497, %v1609
      %v1611 = vpop.f32.mrb[0].mxu0
      %v1612 = vpop.f32.mrb[0].mxu0
      %v1613 = vadd.f32 %v1500, %v1612
      %v1614 = vpop.f32.mrb[0].mxu0
      %1615 = vmatprep.mubr.bf16.mxu0 %v479
      %1616 = vmatmul.mubr.bf16.gmra.mrb[0].mxu0 %v393
      %v1617 = vpop.f32.mrb[0].mxu0
      %v1618 = vadd.f32 %v1505, %v1617
      %v1619 = vpop.f32.mrb[0].mxu0
      %v1620 = vpop.f32.mrb[0].mxu0
      %v1621 = vadd.f32 %v1508, %v1620
      %v1622 = vpop.f32.mrb[0].mxu0
      %1623 = vmatprep.mubr.bf16.mxu0 %v491
      %1624 = vmatmul.mubr.bf16.gmra.mrb[0].mxu0 %v395
      %v1625 = vpop.f32.mrb[0].mxu0
      %v1626 = vadd.f32 %v1513, %v1625
      %v1627 = vpop.f32.mrb[0].mxu0
      %v1628 = vpop.f32.mrb[0].mxu0
      %v1629 = vadd.f32 %v1516, %v1628
      %v1630 = vpop.f32.mrb[0].mxu0
      %1631 = vmatprep.mubr.bf16.mxu0 %v503
      %1632 = vmatmul.mubr.bf16.gmra.mrb[0].mxu0 %v397
      %v1633 = vpop.f32.mrb[0].mxu0
      %v1634 = vadd.f32 %v1521, %v1633
      %v1635 = vpop.f32.mrb[0].mxu0
      %v1636 = vpop.f32.mrb[0].mxu0
      %v1637 = vadd.f32 %v1524, %v1636
      %v1638 = vpop.f32.mrb[0].mxu0
      %1639 = vmatprep.mubr.bf16.mxu0 %v515
      %1640 = vmatmul.mubr.bf16.gmra.mrb[0].mxu0 %v399
      %v1641 = vpop.f32.mrb[0].mxu0
      %v1642 = vadd.f32 %v1529, %v1641
      %v1643 = vpop.f32.mrb[0].mxu0
      %v1644 = vpop.f32.mrb[0].mxu0
      %v1645 = vadd.f32 %v1532, %v1644
      %v1646 = vpop.f32.mrb[0].mxu0
      %1647 = vmatprep.mubr.bf16.mxu0 %v527
      %1648 = vmatmul.mubr.bf16.gmra.mrb[0].mxu0 %v401
      %v1649 = vpop.f32.mrb[0].mxu0
      %v1650 = vadd.f32 %v1537, %v1649
      %v1651 = vpop.f32.mrb[0].mxu0
      %v1652 = vpop.f32.mrb[0].mxu0
      %v1653 = vadd.f32 %v1540, %v1652
      %v1654 = vpop.f32.mrb[0].mxu0
      %1655 = vmatprep.mubr.bf16.mxu0 %v610
      %1656 = vmatmul.mubr.bf16.gmra.mrb[0].mxu0 %v403
      %v1657 = vpop.f32.mrb[0].mxu0
      %v1658 = vadd.f32 %v1545, %v1657
      %v1659 = vpop.f32.mrb[0].mxu0
      %v1660 = vpop.f32.mrb[0].mxu0
      %v1661 = vadd.f32 %v1548, %v1660
      %v1662 = vpop.f32.mrb[0].mxu0
      %1663 = vmatprep.mubr.bf16.mxu0 %v629
      %1664 = vmatmul.mubr.bf16.gmra.mrb[0].mxu0 %v405
      %v1665 = vpop.f32.mrb[0].mxu0
      %v1666 = vadd.f32 %v1553, %v1665
      %v1667 = vpop.f32.mrb[0].mxu0
      %v1668 = vpop.f32.mrb[0].mxu0
      %v1669 = vadd.f32 %v1556, %v1668
      %v1670 = vpop.f32.mrb[0].mxu0
      %1671 = vdwg.mxu0
      %1672 = vmatprep.subr.bf16.mxu0 0
      %1673 = vmatpush1.bf16.msra.mxu0 %v1140
      %1674 = vmatprep.subr.bf16.mxu0 0
      %1675 = vmatpush1.bf16.msra.mxu0 %v1141
      %1676 = vmatprep.subr.bf16.mxu0 0
      %1677 = vmatpush1.bf16.msra.mxu0 %v1142
      %1678 = vmatprep.subr.bf16.mxu0 0
      %1679 = vmatpush1.bf16.msra.mxu0 %v1143
      %1680 = vmatprep.subr.bf16.mxu0 0
      %1681 = vmatpush1.bf16.msra.mxu0 %v1144
      %1682 = vmatprep.subr.bf16.mxu0 0
      %1683 = vmatpush1.bf16.msra.mxu0 %v1145
      %1684 = vmatprep.subr.bf16.mxu0 0
      %1685 = vmatpush1.bf16.msra.mxu0 %v1146
      %1686 = vmatprep.subr.bf16.mxu0 0
      %1687 = vmatpush1.bf16.msra.mxu0 %v1147
      %1688 = vmatprep.subr.bf16.mxu0 0
      %1689 = vmatpush1.bf16.msra.mxu0 0
      %1690 = vmatprep.subr.bf16.mxu0 0
      %1691 = vmatpush1.bf16.msra.mxu0 0
      %1692 = vmatprep.subr.bf16.mxu0 0
      %1693 = vmatpush1.bf16.msra.mxu0 0
      %1694 = vmatprep.subr.bf16.mxu0 0
      %1695 = vmatpush1.bf16.msra.mxu0 0
      %1696 = vmatprep.subr.bf16.mxu0 0
      %1697 = vmatpush1.bf16.msra.mxu0 0
      %1698 = vmatprep.subr.bf16.mxu0 0
      %1699 = vmatpush1.bf16.msra.mxu0 0
      %1700 = vmatprep.subr.bf16.mxu0 0
      %1701 = vmatpush1.bf16.msra.mxu0 0
      %1702 = vmatprep.subr.bf16.mxu0 0
      %1703 = vmatpush1.bf16.msra.mxu0 0
      %1704 = vmatprep.mubr.bf16.mxu0 0
      %1705 = vmatmul.mubr.bf16.gmra.mrb[0].mxu0 %v567
      %v1706 = vpop.f32.mrb[0].mxu0
      %v1707 = vadd.f32 %v1594, %v1706
      %v1708 = vpop.f32.mrb[0].mxu0
      %v1709 = vpop.f32.mrb[0].mxu0
      %v1710 = vadd.f32 %v1597, %v1709
      %v1711 = vpop.f32.mrb[0].mxu0
      %1712 = vmatprep.mubr.bf16.mxu0 0
      %1713 = vmatmul.mubr.bf16.gmra.mrb[0].mxu0 %v570
      %v1714 = vpop.f32.mrb[0].mxu0
      %v1715 = vadd.f32 %v1602, %v1714
      %v1716 = vpop.f32.mrb[0].mxu0
      %v1717 = vpop.f32.mrb[0].mxu0
      %v1718 = vadd.f32 %v1605, %v1717
      %v1719 = vpop.f32.mrb[0].mxu0
      %1720 = vmatprep.mubr.bf16.mxu0 0
      %1721 = vmatmul.mubr.bf16.gmra.mrb[0].mxu0 %v573
      %v1722 = vpop.f32.mrb[0].mxu0
      %v1723 = vadd.f32 %v1610, %v1722
      %v1724 = vpop.f32.mrb[0].mxu0
      %v1725 = vpop.f32.mrb[0].mxu0
      %v1726 = vadd.f32 %v1613, %v1725
      %v1727 = vpop.f32.mrb[0].mxu0
      %1728 = vmatprep.mubr.bf16.mxu0 0
      %1729 = vmatmul.mubr.bf16.gmra.mrb[0].mxu0 %v576
      %v1730 = vpop.f32.mrb[0].mxu0
      %v1731 = vadd.f32 %v1618, %v1730
      %v1732 = vpop.f32.mrb[0].mxu0
      %v1733 = vpop.f32.mrb[0].mxu0
      %v1734 = vadd.f32 %v1621, %v1733
      %v1735 = vpop.f32.mrb[0].mxu0
      %1736 = vmatprep.mubr.bf16.mxu0 0
      %1737 = vmatmul.mubr.bf16.gmra.mrb[0].mxu0 %v579
      %v1738 = vpop.f32.mrb[0].mxu0
      %v1739 = vadd.f32 %v1626, %v1738
      %v1740 = vpop.f32.mrb[0].mxu0
      %v1741 = vpop.f32.mrb[0].mxu0
      %v1742 = vadd.f32 %v1629, %v1741
      %v1743 = vpop.f32.mrb[0].mxu0
      %1744 = vmatprep.mubr.bf16.mxu0 0
      %1745 = vmatmul.mubr.bf16.gmra.mrb[0].mxu0 %v582
      %v1746 = vpop.f32.mrb[0].mxu0
      %v1747 = vadd.f32 %v1634, %v1746
      %v1748 = vpop.f32.mrb[0].mxu0
      %v1749 = vpop.f32.mrb[0].mxu0
      %v1750 = vadd.f32 %v1637, %v1749
      %v1751 = vpop.f32.mrb[0].mxu0
      %1752 = vmatprep.mubr.bf16.mxu0 0
      %1753 = vmatmul.mubr.bf16.gmra.mrb[0].mxu0 %v585
      %v1754 = vpop.f32.mrb[0].mxu0
      %v1755 = vadd.f32 %v1642, %v1754
      %v1756 = vpop.f32.mrb[0].mxu0
      %v1757 = vpop.f32.mrb[0].mxu0
      %v1758 = vadd.f32 %v1645, %v1757
      %v1759 = vpop.f32.mrb[0].mxu0
      %1760 = vmatprep.mubr.bf16.mxu0 0
      %1761 = vmatmul.mubr.bf16.gmra.mrb[0].mxu0 %v588
      %v1762 = vpop.f32.mrb[0].mxu0
      %v1763 = vadd.f32 %v1650, %v1762
      %v1764 = vpop.f32.mrb[0].mxu0
      %v1765 = vpop.f32.mrb[0].mxu0
      %v1766 = vadd.f32 %v1653, %v1765
      %v1767 = vpop.f32.mrb[0].mxu0
      %1768 = vmatprep.mubr.bf16.mxu0 0
      %1769 = vmatmul.mubr.bf16.gmra.mrb[0].mxu0 %v616
      %v1770 = vpop.f32.mrb[0].mxu0
      %v1771 = vadd.f32 %v1658, %v1770
      %v1772 = vpop.f32.mrb[0].mxu0
      %v1773 = vpop.f32.mrb[0].mxu0
      %v1774 = vadd.f32 %v1661, %v1773
      %v1775 = vpop.f32.mrb[0].mxu0
      %1776 = vmatprep.mubr.bf16.mxu0 0
      %1777 = vmatmul.mubr.bf16.gmra.mrb[0].mxu0 %v635
      %v1778 = vpop.f32.mrb[0].mxu0
      %v1779 = vadd.f32 %v1666, %v1778
      %v1780 = vpop.f32.mrb[0].mxu0
      %v1781 = vpop.f32.mrb[0].mxu0
      %v1782 = vadd.f32 %v1669, %v1781
      %v1783 = vpop.f32.mrb[0].mxu0
      %1784 = vdwg.mxu0
      %v1785 = vmax.f32 %v1707, 0.0
      %v1786 = vmax.f32 %v1710, 0.0
      %v1787 = vmax.f32 %v1715, 0.0
      %v1788 = vmax.f32 %v1718, 0.0
      %v1789 = vmax.f32 %v1723, 0.0
      %v1790 = vmax.f32 %v1726, 0.0
      %v1791 = vmax.f32 %v1731, 0.0
      %v1792 = vmax.f32 %v1734, 0.0
      %v1793 = vmax.f32 %v1739, 0.0
      %v1794 = vmax.f32 %v1742, 0.0
      %v1795 = vmax.f32 %v1747, 0.0
      %v1796 = vmax.f32 %v1750, 0.0
      %v1797 = vmax.f32 %v1755, 0.0
      %v1798 = vmax.f32 %v1758, 0.0
      %v1799 = vmax.f32 %v1763, 0.0
      %v1800 = vmax.f32 %v1766, 0.0
      %v1801 = vmax.f32 %v1771, 0.0
      %v1802 = vmax.f32 %v1774, 0.0
      %v1803 = vmax.f32 %v1779, 0.0
      %v1804 = vmax.f32 %v1782, 0.0
      %s1805 = ssub.s32 %s265, 1
      %v1806 = vstv %s1805
      %v1807 = vadd.s32 %v1806, 1
      %v1808 = vadd.s32 %v1806, 2
      %v1809 = vadd.s32 %v1806, 3
      %v1810 = vadd.s32 %v1806, 4
      %v1811 = vadd.s32 %v1806, 5
      %v1812 = vadd.s32 %v1806, 6
      %v1813 = vadd.s32 %v1806, 7
      %v1814 = vadd.s32 %v1806, 8
      %v1815 = vadd.s32 %v1806, 9
      %vm1816 = vcmp.ge.s32.totalorder %v1806, 0
      %vm1817 = vcmp.ge.s32.totalorder %v1807, 0
      %vm1818 = vcmp.ge.s32.totalorder %v1808, 0
      %vm1819 = vcmp.ge.s32.totalorder %v1809, 0
      %vm1820 = vcmp.ge.s32.totalorder %v1810, 0
      %vm1821 = vcmp.ge.s32.totalorder %v1811, 0
      %vm1822 = vcmp.ge.s32.totalorder %v1812, 0
      %vm1823 = vcmp.ge.s32.totalorder %v1813, 0
      %vm1824 = vcmp.ge.s32.totalorder %v1814, 0
      %vm1825 = vcmp.ge.s32.totalorder %v1815, 0
      %vm1826 = vcmp.le.s32.totalorder %v1806, 15
      %vm1827 = vcmp.le.s32.totalorder %v1807, 15
      %vm1828 = vcmp.le.s32.totalorder %v1808, 15
      %vm1829 = vcmp.le.s32.totalorder %v1809, 15
      %vm1830 = vcmp.le.s32.totalorder %v1810, 15
      %vm1831 = vcmp.le.s32.totalorder %v1811, 15
      %vm1832 = vcmp.le.s32.totalorder %v1812, 15
      %vm1833 = vcmp.le.s32.totalorder %v1813, 15
      %vm1834 = vcmp.le.s32.totalorder %v1814, 15
      %vm1835 = vcmp.le.s32.totalorder %v1815, 15
      %vm1836 = vmand %vm1816, %vm1826
      %vm1837 = vmand %vm1817, %vm1827
      %vm1838 = vmand %vm1818, %vm1828
      %vm1839 = vmand %vm1819, %vm1829
      %vm1840 = vmand %vm1820, %vm1830
      %vm1841 = vmand %vm1821, %vm1831
      %vm1842 = vmand %vm1822, %vm1832
      %vm1843 = vmand %vm1823, %vm1833
      %vm1844 = vmand %vm1824, %vm1834
      %vm1845 = vmand %vm1825, %vm1835
      %v1846 = vsel %vm1836, 1, 0
      %v1847 = vsel %vm1837, 1, 0
      %v1848 = vsel %vm1838, 1, 0
      %v1849 = vsel %vm1839, 1, 0
      %v1850 = vsel %vm1840, 1, 0
      %v1851 = vsel %vm1841, 1, 0
      %v1852 = vsel %vm1842, 1, 0
      %v1853 = vsel %vm1843, 1, 0
      %v1854 = vsel %vm1844, 1, 0
      %v1855 = vsel %vm1845, 1, 0
      %vm1856 = vcmp.eq.s32.totalorder %v1846, 1
      %vm1857 = vcmp.eq.s32.totalorder %v1847, 1
      %vm1858 = vcmp.eq.s32.totalorder %v1848, 1
      %vm1859 = vcmp.eq.s32.totalorder %v1849, 1
      %vm1860 = vcmp.eq.s32.totalorder %v1850, 1
      %vm1861 = vcmp.eq.s32.totalorder %v1851, 1
      %vm1862 = vcmp.eq.s32.totalorder %v1852, 1
      %vm1863 = vcmp.eq.s32.totalorder %v1853, 1
      %vm1864 = vcmp.eq.s32.totalorder %v1854, 1
      %vm1865 = vcmp.eq.s32.totalorder %v1855, 1
      %v1866 = vsel %vm1856, %v1785, 0.0
      %v1867 = vsel %vm1856, %v1786, 0.0
      %v1868 = vsel %vm1857, %v1787, 0.0
      %v1869 = vsel %vm1857, %v1788, 0.0
      %v1870 = vsel %vm1858, %v1789, 0.0
      %v1871 = vsel %vm1858, %v1790, 0.0
      %v1872 = vsel %vm1859, %v1791, 0.0
      %v1873 = vsel %vm1859, %v1792, 0.0
      %v1874 = vsel %vm1860, %v1793, 0.0
      %v1875 = vsel %vm1860, %v1794, 0.0
      %v1876 = vsel %vm1861, %v1795, 0.0
      %v1877 = vsel %vm1861, %v1796, 0.0
      %v1878 = vsel %vm1862, %v1797, 0.0
      %v1879 = vsel %vm1862, %v1798, 0.0
      %v1880 = vsel %vm1863, %v1799, 0.0
      %v1881 = vsel %vm1863, %v1800, 0.0
      %v1882 = vsel %vm1864, %v1801, 0.0
      %v1883 = vsel %vm1864, %v1802, 0.0
      %v1884 = vsel %vm1865, %v1803, 0.0
      %v1885 = vsel %vm1865, %v1804, 0.0
      %v1886 = vpack.c.bf16 %v1867, %v1866
      %v1887 = vpack.c.bf16 %v1869, %v1868
      %v1888 = vpack.c.bf16 %v1871, %v1870
      %v1889 = vpack.c.bf16 %v1873, %v1872
      %v1890 = vpack.c.bf16 %v1875, %v1874
      %v1891 = vpack.c.bf16 %v1877, %v1876
      %v1892 = vpack.c.bf16 %v1879, %v1878
      %v1893 = vpack.c.bf16 %v1881, %v1880
      %v1894 = vpack.c.bf16 %v1883, %v1882
      %v1895 = vpack.c.bf16 %v1885, %v1884
      %v1897 = vshrl.u32 %v1886, 16
      %v1899 = vrot.slane %v1897, 7
      %v1900 = vshll.u32 %v1886, 16
      %v1902 = vor.u32 %v1899, %v1900
      %v1904 = vshrl.u32 %v1887, 16
      %v1906 = vrot.slane %v1904, 7
      %v1907 = vshll.u32 %v1887, 16
      %v1909 = vor.u32 %v1906, %v1907
      %v1911 = vshrl.u32 %v1888, 16
      %v1913 = vrot.slane %v1911, 7
      %v1914 = vshll.u32 %v1888, 16
      %v1916 = vor.u32 %v1913, %v1914
      %v1918 = vshrl.u32 %v1889, 16
      %v1920 = vrot.slane %v1918, 7
      %v1921 = vshll.u32 %v1889, 16
      %v1923 = vor.u32 %v1920, %v1921
      %v1925 = vshrl.u32 %v1890, 16
      %v1927 = vrot.slane %v1925, 7
      %v1928 = vshll.u32 %v1890, 16
      %v1930 = vor.u32 %v1927, %v1928
      %v1932 = vshrl.u32 %v1891, 16
      %v1934 = vrot.slane %v1932, 7
      %v1935 = vshll.u32 %v1891, 16
      %v1937 = vor.u32 %v1934, %v1935
      %v1939 = vshrl.u32 %v1892, 16
      %v1941 = vrot.slane %v1939, 7
      %v1942 = vshll.u32 %v1892, 16
      %v1944 = vor.u32 %v1941, %v1942
      %v1946 = vshrl.u32 %v1893, 16
      %v1948 = vrot.slane %v1946, 7
      %v1949 = vshll.u32 %v1893, 16
      %v1951 = vor.u32 %v1948, %v1949
      %v1953 = vshrl.u32 %v1894, 16
      %v1955 = vrot.slane %v1953, 7
      %v1956 = vshll.u32 %v1894, 16
      %v1958 = vor.u32 %v1955, %v1956
      %v1960 = vshrl.u32 %v1895, 16
      %v1962 = vrot.slane %v1960, 7
      %v1963 = vshll.u32 %v1895, 16
      %v1965 = vor.u32 %v1962, %v1963
      %vm1986 = vcmask 1040384
      %vm1987 = vsmask.f32 256
      %vm1988 = vmand %vm1986, %vm1987
      %v1989 = vsel %vm1988, 0, %v1902
      %v1990 = vsel %vm1988, 0, %v1909
      %v1991 = vsel %vm1988, 0, %v1916
      %v1992 = vsel %vm1988, 0, %v1923
      %v1993 = vsel %vm1988, 0, %v1930
      %v1994 = vsel %vm1988, 0, %v1937
      %v1995 = vsel %vm1988, 0, %v1944
      %v1996 = vsel %vm1988, 0, %v1951
      %v1997 = vsel %vm1988, 0, %v1958
      %v1998 = vsel %vm1988, 0, %v1965
      %v1999 = vsel %vm1988, %v1899, 0
      %v2000 = vsel %vm1988, %v1906, 0
      %v2001 = vsel %vm1988, %v1913, 0
      %v2002 = vsel %vm1988, %v1920, 0
      %v2003 = vsel %vm1988, %v1927, 0
      %v2004 = vsel %vm1988, %v1934, 0
      %v2005 = vsel %vm1988, %v1941, 0
      %v2006 = vsel %vm1988, %v1948, 0
      %v2007 = vsel %vm1988, %v1955, 0
      %v2008 = vsel %vm1988, %v1962, 0
      %v2010 = vshrl.u32 %v1989, 16
      %v2012 = vshll.u32 %v1989, 16
      %v2014 = vrot.slane %v2012, 1
      %v2015 = vor.u32 %v2010, %v2014
      %v2017 = vshll.u32 %v1999, 16
      %v2019 = vrot.slane %v2017, 1
      %v2020 = vsel %vm407, %v2015, %v2019
      %v2022 = vshrl.u32 %v1990, 16
      %v2024 = vshll.u32 %v1990, 16
      %v2026 = vrot.slane %v2024, 1
      %v2027 = vor.u32 %v2022, %v2026
      %v2029 = vshll.u32 %v2000, 16
      %v2031 = vrot.slane %v2029, 1
      %v2032 = vsel %vm407, %v2027, %v2031
      %v2034 = vshrl.u32 %v1991, 16
      %v2036 = vshll.u32 %v1991, 16
      %v2038 = vrot.slane %v2036, 1
      %v2039 = vor.u32 %v2034, %v2038
      %v2041 = vshll.u32 %v2001, 16
      %v2043 = vrot.slane %v2041, 1
      %v2044 = vsel %vm407, %v2039, %v2043
      %v2046 = vshrl.u32 %v1992, 16
      %v2048 = vshll.u32 %v1992, 16
      %v2050 = vrot.slane %v2048, 1
      %v2051 = vor.u32 %v2046, %v2050
      %v2053 = vshll.u32 %v2002, 16
      %v2055 = vrot.slane %v2053, 1
      %v2056 = vsel %vm407, %v2051, %v2055
      %v2058 = vshrl.u32 %v1993, 16
      %v2060 = vshll.u32 %v1993, 16
      %v2062 = vrot.slane %v2060, 1
      %v2063 = vor.u32 %v2058, %v2062
      %v2065 = vshll.u32 %v2003, 16
      %v2067 = vrot.slane %v2065, 1
      %v2068 = vsel %vm407, %v2063, %v2067
      %v2070 = vshrl.u32 %v1994, 16
      %v2072 = vshll.u32 %v1994, 16
      %v2074 = vrot.slane %v2072, 1
      %v2075 = vor.u32 %v2070, %v2074
      %v2077 = vshll.u32 %v2004, 16
      %v2079 = vrot.slane %v2077, 1
      %v2080 = vsel %vm407, %v2075, %v2079
      %v2082 = vshrl.u32 %v1995, 16
      %v2084 = vshll.u32 %v1995, 16
      %v2086 = vrot.slane %v2084, 1
      %v2087 = vor.u32 %v2082, %v2086
      %v2089 = vshll.u32 %v2005, 16
      %v2091 = vrot.slane %v2089, 1
      %v2092 = vsel %vm407, %v2087, %v2091
      %v2094 = vshrl.u32 %v1996, 16
      %v2096 = vshll.u32 %v1996, 16
      %v2098 = vrot.slane %v2096, 1
      %v2099 = vor.u32 %v2094, %v2098
      %v2101 = vshll.u32 %v2006, 16
      %v2103 = vrot.slane %v2101, 1
      %v2104 = vsel %vm407, %v2099, %v2103
      %v2129 = vrot.slane %v1989, 1
      %v2130 = vrot.slane %v1999, 1
      %v2131 = vsel %vm558, %v2129, %v2130
      %v2132 = vrot.slane %v1990, 1
      %v2133 = vrot.slane %v2000, 1
      %v2134 = vsel %vm558, %v2132, %v2133
      %v2135 = vrot.slane %v1991, 1
      %v2136 = vrot.slane %v2001, 1
      %v2137 = vsel %vm558, %v2135, %v2136
      %v2138 = vrot.slane %v1992, 1
      %v2139 = vrot.slane %v2002, 1
      %v2140 = vsel %vm558, %v2138, %v2139
      %v2141 = vrot.slane %v1993, 1
      %v2142 = vrot.slane %v2003, 1
      %v2143 = vsel %vm558, %v2141, %v2142
      %v2144 = vrot.slane %v1994, 1
      %v2145 = vrot.slane %v2004, 1
      %v2146 = vsel %vm558, %v2144, %v2145
      %v2147 = vrot.slane %v1995, 1
      %v2148 = vrot.slane %v2005, 1
      %v2149 = vsel %vm558, %v2147, %v2148
      %v2150 = vrot.slane %v1996, 1
      %v2151 = vrot.slane %v2006, 1
      %v2152 = vsel %vm558, %v2150, %v2151
      %v2162 = vshrl.u32 %v1997, 16
      %v2164 = vshll.u32 %v1997, 16
      %v2166 = vrot.slane %v2164, 1
      %v2167 = vor.u32 %v2162, %v2166
      %v2169 = vshll.u32 %v2007, 16
      %v2171 = vrot.slane %v2169, 1
      %v2172 = vsel %vm407, %v2167, %v2171
      %v2176 = vrot.slane %v1997, 1
      %v2177 = vrot.slane %v2007, 1
      %v2178 = vsel %vm558, %v2176, %v2177
      %v2181 = vshrl.u32 %v1998, 16
      %v2183 = vshll.u32 %v1998, 16
      %v2185 = vrot.slane %v2183, 1
      %v2186 = vor.u32 %v2181, %v2185
      %v2188 = vshll.u32 %v2008, 16
      %v2190 = vrot.slane %v2188, 1
      %v2191 = vsel %vm407, %v2186, %v2190
      %v2195 = vrot.slane %v1998, 1
      %v2196 = vrot.slane %v2008, 1
      %v2197 = vsel %vm558, %v2195, %v2196
      %v2199 = vld [vmem:[%s3] sm:$0xf]
      %v2200 = vld [vmem:[%s3 + $0x4] sm:$0xf]
      %v2201 = vld [vmem:[%s3 + $0x8] sm:$0xf]
      %v2202 = vld [vmem:[%s3 + $0xc] sm:$0xf]
      %v2203 = vld [vmem:[%s3 + $0x10] sm:$0xf]
      %v2204 = vld [vmem:[%s3 + $0x14] sm:$0xf]
      %v2205 = vld [vmem:[%s3 + $0x18] sm:$0xf]
      %v2206 = vld [vmem:[%s3 + $0x1c] sm:$0xf]
      %v2207 = vld [vmem:[%s3 + $0x20] sm:$0xf]
      %v2208 = vld [vmem:[%s3 + $0x24] sm:$0xf]
      %v2209 = vld [vmem:[%s3 + $0x28] sm:$0xf]
      %v2210 = vld [vmem:[%s3 + $0x2c] sm:$0xf]
      %v2211 = vld [vmem:[%s3 + $0x30] sm:$0xf]
      %v2212 = vld [vmem:[%s3 + $0x34] sm:$0xf]
      %v2213 = vld [vmem:[%s3 + $0x38] sm:$0xf]
      %v2214 = vld [vmem:[%s3 + $0x3c] sm:$0xf]
      %v2215 = vld [vmem:[%s3 + $0x40] sm:$0xf]
      %v2216 = vld [vmem:[%s3 + $0x44] sm:$0xf]
      %v2217 = vld [vmem:[%s3 + $0x48] sm:$0xf]
      %v2218 = vld [vmem:[%s3 + $0x4c] sm:$0xf]
      %v2219 = vld [vmem:[%s3 + $0x50] sm:$0xf]
      %v2220 = vld [vmem:[%s3 + $0x54] sm:$0xf]
      %v2221 = vld [vmem:[%s3 + $0x58] sm:$0xf]
      %v2222 = vld [vmem:[%s3 + $0x5c] sm:$0xf]
      %v2223 = vld [vmem:[%s3 + $0x60] sm:$0xf]
      %v2224 = vld [vmem:[%s3 + $0x64] sm:$0xf]
      %v2225 = vld [vmem:[%s3 + $0x68] sm:$0xf]
      %v2226 = vld [vmem:[%s3 + $0x6c] sm:$0xf]
      %v2227 = vld [vmem:[%s3 + $0x70] sm:$0xf]
      %v2228 = vld [vmem:[%s3 + $0x74] sm:$0xf]
      %v2229 = vld [vmem:[%s3 + $0x78] sm:$0xf]
      %v2230 = vld [vmem:[%s3 + $0x7c] sm:$0xf]
      %v2231 = vld [vmem:[%s3 + $0x80] sm:$0xf]
      %v2232 = vld [vmem:[%s3 + $0x84] sm:$0xf]
      %v2233 = vld [vmem:[%s3 + $0x88] sm:$0xf]
      %v2234 = vld [vmem:[%s3 + $0x8c] sm:$0xf]
      %v2235 = vld [vmem:[%s3 + $0x90] sm:$0xf]
      %v2236 = vld [vmem:[%s3 + $0x94] sm:$0xf]
      %v2237 = vld [vmem:[%s3 + $0x98] sm:$0xf]
      %v2238 = vld [vmem:[%s3 + $0x9c] sm:$0xf]
      %v2239 = vld [vmem:[%s3 + $0xa0] sm:$0xf]
      %v2240 = vld [vmem:[%s3 + $0xa4] sm:$0xf]
      %v2241 = vld [vmem:[%s3 + $0xa8] sm:$0xf]
      %v2242 = vld [vmem:[%s3 + $0xac] sm:$0xf]
      %v2243 = vld [vmem:[%s3 + $0xb0] sm:$0xf]
      %v2244 = vld [vmem:[%s3 + $0xb4] sm:$0xf]
      %v2245 = vld [vmem:[%s3 + $0xb8] sm:$0xf]
      %v2246 = vld [vmem:[%s3 + $0xbc] sm:$0xf]
      %v2247 = vld [vmem:[%s3 + $0xc0] sm:$0xf]
      %v2248 = vld [vmem:[%s3 + $0xc4] sm:$0xf]
      %v2249 = vld [vmem:[%s3 + $0xc8] sm:$0xf]
      %v2250 = vld [vmem:[%s3 + $0xcc] sm:$0xf]
      %v2251 = vld [vmem:[%s3 + $0xd0] sm:$0xf]
      %v2252 = vld [vmem:[%s3 + $0xd4] sm:$0xf]
      %v2253 = vld [vmem:[%s3 + $0xd8] sm:$0xf]
      %v2254 = vld [vmem:[%s3 + $0xdc] sm:$0xf]
      %v2255 = vld [vmem:[%s3 + $0xe0] sm:$0xf]
      %v2256 = vld [vmem:[%s3 + $0xe4] sm:$0xf]
      %v2257 = vld [vmem:[%s3 + $0xe8] sm:$0xf]
      %v2258 = vld [vmem:[%s3 + $0xec] sm:$0xf]
      %v2259 = vld [vmem:[%s3 + $0xf0] sm:$0xf]
      %v2260 = vld [vmem:[%s3 + $0xf4] sm:$0xf]
      %v2261 = vld [vmem:[%s3 + $0xf8] sm:$0xf]
      %v2262 = vld [vmem:[%s3 + $0xfc] sm:$0xf]
      %v2263 = vld [vmem:[%s3 + $0x100] sm:$0xf]
      %v2264 = vld [vmem:[%s3 + $0x104] sm:$0xf]
      %v2265 = vld [vmem:[%s3 + $0x108] sm:$0xf]
      %v2266 = vld [vmem:[%s3 + $0x10c] sm:$0xf]
      %v2267 = vld [vmem:[%s3 + $0x110] sm:$0xf]
      %v2268 = vld [vmem:[%s3 + $0x114] sm:$0xf]
      %v2269 = vld [vmem:[%s3 + $0x118] sm:$0xf]
      %v2270 = vld [vmem:[%s3 + $0x11c] sm:$0xf]
      %v2271 = vld [vmem:[%s3 + $0x120] sm:$0xf]
      %v2272 = vld [vmem:[%s3 + $0x124] sm:$0xf]
      %v2273 = vld [vmem:[%s3 + $0x128] sm:$0xf]
      %v2274 = vld [vmem:[%s3 + $0x12c] sm:$0xf]
      %v2275 = vld [vmem:[%s3 + $0x130] sm:$0xf]
      %v2276 = vld [vmem:[%s3 + $0x134] sm:$0xf]
      %v2277 = vld [vmem:[%s3 + $0x138] sm:$0xf]
      %v2278 = vld [vmem:[%s3 + $0x13c] sm:$0xf]
      %v2279 = vld [vmem:[%s3 + $0x140] sm:$0xf]
      %v2280 = vld [vmem:[%s3 + $0x144] sm:$0xf]
      %v2281 = vld [vmem:[%s3 + $0x148] sm:$0xf]
      %v2282 = vld [vmem:[%s3 + $0x14c] sm:$0xf]
      %v2283 = vld [vmem:[%s3 + $0x150] sm:$0xf]
      %v2284 = vld [vmem:[%s3 + $0x154] sm:$0xf]
      %v2285 = vld [vmem:[%s3 + $0x158] sm:$0xf]
      %v2286 = vld [vmem:[%s3 + $0x15c] sm:$0xf]
      %v2287 = vld [vmem:[%s3 + $0x160] sm:$0xf]
      %v2288 = vld [vmem:[%s3 + $0x164] sm:$0xf]
      %v2289 = vld [vmem:[%s3 + $0x168] sm:$0xf]
      %v2290 = vld [vmem:[%s3 + $0x16c] sm:$0xf]
      %v2291 = vld [vmem:[%s3 + $0x170] sm:$0xf]
      %v2292 = vld [vmem:[%s3 + $0x174] sm:$0xf]
      %v2293 = vld [vmem:[%s3 + $0x178] sm:$0xf]
      %v2294 = vld [vmem:[%s3 + $0x17c] sm:$0xf]
      %v2295 = vld [vmem:[%s3 + $0x180] sm:$0xf]
      %v2296 = vld [vmem:[%s3 + $0x184] sm:$0xf]
      %v2297 = vld [vmem:[%s3 + $0x188] sm:$0xf]
      %v2298 = vld [vmem:[%s3 + $0x18c] sm:$0xf]
      %v2299 = vld [vmem:[%s3 + $0x190] sm:$0xf]
      %v2300 = vld [vmem:[%s3 + $0x194] sm:$0xf]
      %v2301 = vld [vmem:[%s3 + $0x198] sm:$0xf]
      %v2302 = vld [vmem:[%s3 + $0x19c] sm:$0xf]
      %v2303 = vld [vmem:[%s3 + $0x1a0] sm:$0xf]
      %v2304 = vld [vmem:[%s3 + $0x1a4] sm:$0xf]
      %v2305 = vld [vmem:[%s3 + $0x1a8] sm:$0xf]
      %v2306 = vld [vmem:[%s3 + $0x1ac] sm:$0xf]
      %v2307 = vld [vmem:[%s3 + $0x1b0] sm:$0xf]
      %v2308 = vld [vmem:[%s3 + $0x1b4] sm:$0xf]
      %v2309 = vld [vmem:[%s3 + $0x1b8] sm:$0xf]
      %v2310 = vld [vmem:[%s3 + $0x1bc] sm:$0xf]
      %v2311 = vld [vmem:[%s3 + $0x1c0] sm:$0xf]
      %v2312 = vld [vmem:[%s3 + $0x1c4] sm:$0xf]
      %v2313 = vld [vmem:[%s3 + $0x1c8] sm:$0xf]
      %v2314 = vld [vmem:[%s3 + $0x1cc] sm:$0xf]
      %v2315 = vld [vmem:[%s3 + $0x1d0] sm:$0xf]
      %v2316 = vld [vmem:[%s3 + $0x1d4] sm:$0xf]
      %v2317 = vld [vmem:[%s3 + $0x1d8] sm:$0xf]
      %v2318 = vld [vmem:[%s3 + $0x1dc] sm:$0xf]
      %v2319 = vld [vmem:[%s3 + $0x1e0] sm:$0xf]
      %v2320 = vld [vmem:[%s3 + $0x1e4] sm:$0xf]
      %v2321 = vld [vmem:[%s3 + $0x1e8] sm:$0xf]
      %v2322 = vld [vmem:[%s3 + $0x1ec] sm:$0xf]
      %v2323 = vld [vmem:[%s3 + $0x1f0] sm:$0xf]
      %v2324 = vld [vmem:[%s3 + $0x1f4] sm:$0xf]
      %v2325 = vld [vmem:[%s3 + $0x1f8] sm:$0xf]
      %v2326 = vld [vmem:[%s3 + $0x1fc] sm:$0xf]
      %v2327 = vld [vmem:[%s3 + $0x200] sm:$0xf]
      %v2328 = vld [vmem:[%s3 + $0x204] sm:$0xf]
      %v2329 = vld [vmem:[%s3 + $0x208] sm:$0xf]
      %v2330 = vld [vmem:[%s3 + $0x20c] sm:$0xf]
      %v2331 = vld [vmem:[%s3 + $0x210] sm:$0xf]
      %v2332 = vld [vmem:[%s3 + $0x214] sm:$0xf]
      %v2333 = vld [vmem:[%s3 + $0x218] sm:$0xf]
      %v2334 = vld [vmem:[%s3 + $0x21c] sm:$0xf]
      %v2335 = vld [vmem:[%s3 + $0x220] sm:$0xf]
      %v2336 = vld [vmem:[%s3 + $0x224] sm:$0xf]
      %v2337 = vld [vmem:[%s3 + $0x228] sm:$0xf]
      %v2338 = vld [vmem:[%s3 + $0x22c] sm:$0xf]
      %v2339 = vld [vmem:[%s3 + $0x230] sm:$0xf]
      %v2340 = vld [vmem:[%s3 + $0x234] sm:$0xf]
      %v2341 = vld [vmem:[%s3 + $0x238] sm:$0xf]
      %v2342 = vld [vmem:[%s3 + $0x23c] sm:$0xf]
      %v2343 = vld [vmem:[%s4] sm:$0x1]
      %v2345 = vlaneseq
      %v2346 = vshrl.u32 %v2345, 7
      %v2347 = vsub.s32 0, %v2346
      %v2348 = vrot.slane %v2343, %v2347
      %v2494 = vunpack.c.l.b16 %v2199
      %v2495 = vunpack.c.l.b16 %v2200
      %v2496 = vunpack.c.l.b16 %v2201
      %v2497 = vunpack.c.l.b16 %v2202
      %v2498 = vunpack.c.l.b16 %v2203
      %v2499 = vunpack.c.l.b16 %v2204
      %v2500 = vunpack.c.l.b16 %v2205
      %v2501 = vunpack.c.l.b16 %v2206
      %v2502 = vunpack.c.l.b16 %v2207
      %v2503 = vunpack.c.l.b16 %v2208
      %v2504 = vunpack.c.l.b16 %v2209
      %v2505 = vunpack.c.l.b16 %v2210
      %v2506 = vunpack.c.l.b16 %v2211
      %v2507 = vunpack.c.l.b16 %v2212
      %v2508 = vunpack.c.l.b16 %v2213
      %v2509 = vunpack.c.l.b16 %v2214
      %v2510 = vunpack.c.l.b16 %v2215
      %v2511 = vunpack.c.l.b16 %v2216
      %v2512 = vunpack.c.l.b16 %v2217
      %v2513 = vunpack.c.l.b16 %v2218
      %v2514 = vunpack.c.l.b16 %v2219
      %v2515 = vunpack.c.l.b16 %v2220
      %v2516 = vunpack.c.l.b16 %v2221
      %v2517 = vunpack.c.l.b16 %v2222
      %v2518 = vunpack.c.l.b16 %v2223
      %v2519 = vunpack.c.l.b16 %v2224
      %v2520 = vunpack.c.l.b16 %v2225
      %v2521 = vunpack.c.l.b16 %v2226
      %v2522 = vunpack.c.l.b16 %v2227
      %v2523 = vunpack.c.l.b16 %v2228
      %v2524 = vunpack.c.l.b16 %v2229
      %v2525 = vunpack.c.l.b16 %v2230
      %v2526 = vunpack.c.l.b16 %v2231
      %v2527 = vunpack.c.l.b16 %v2232
      %v2528 = vunpack.c.l.b16 %v2233
      %v2529 = vunpack.c.l.b16 %v2234
      %v2530 = vunpack.c.l.b16 %v2235
      %v2531 = vunpack.c.l.b16 %v2236
      %v2532 = vunpack.c.l.b16 %v2237
      %v2533 = vunpack.c.l.b16 %v2238
      %v2534 = vunpack.c.l.b16 %v2239
      %v2535 = vunpack.c.l.b16 %v2240
      %v2536 = vunpack.c.l.b16 %v2241
      %v2537 = vunpack.c.l.b16 %v2242
      %v2538 = vunpack.c.l.b16 %v2243
      %v2539 = vunpack.c.l.b16 %v2244
      %v2540 = vunpack.c.l.b16 %v2245
      %v2541 = vunpack.c.l.b16 %v2246
      %v2542 = vunpack.c.l.b16 %v2247
      %v2543 = vunpack.c.l.b16 %v2248
      %v2544 = vunpack.c.l.b16 %v2249
      %v2545 = vunpack.c.l.b16 %v2250
      %v2546 = vunpack.c.l.b16 %v2251
      %v2547 = vunpack.c.l.b16 %v2252
      %v2548 = vunpack.c.l.b16 %v2253
      %v2549 = vunpack.c.l.b16 %v2254
      %v2550 = vunpack.c.l.b16 %v2255
      %v2551 = vunpack.c.l.b16 %v2256
      %v2552 = vunpack.c.l.b16 %v2257
      %v2553 = vunpack.c.l.b16 %v2258
      %v2554 = vunpack.c.l.b16 %v2259
      %v2555 = vunpack.c.l.b16 %v2260
      %v2556 = vunpack.c.l.b16 %v2261
      %v2557 = vunpack.c.l.b16 %v2262
      %v2558 = vunpack.c.l.b16 %v2263
      %v2559 = vunpack.c.l.b16 %v2264
      %v2560 = vunpack.c.l.b16 %v2265
      %v2561 = vunpack.c.l.b16 %v2266
      %v2562 = vunpack.c.l.b16 %v2267
      %v2563 = vunpack.c.l.b16 %v2268
      %v2564 = vunpack.c.l.b16 %v2269
      %v2565 = vunpack.c.l.b16 %v2270
      %v2566 = vunpack.c.l.b16 %v2271
      %v2567 = vunpack.c.l.b16 %v2272
      %v2568 = vunpack.c.l.b16 %v2273
      %v2569 = vunpack.c.l.b16 %v2274
      %v2570 = vunpack.c.l.b16 %v2275
      %v2571 = vunpack.c.l.b16 %v2276
      %v2572 = vunpack.c.l.b16 %v2277
      %v2573 = vunpack.c.l.b16 %v2278
      %v2574 = vunpack.c.l.b16 %v2279
      %v2575 = vunpack.c.l.b16 %v2280
      %v2576 = vunpack.c.l.b16 %v2281
      %v2577 = vunpack.c.l.b16 %v2282
      %v2578 = vunpack.c.l.b16 %v2283
      %v2579 = vunpack.c.l.b16 %v2284
      %v2580 = vunpack.c.l.b16 %v2285
      %v2581 = vunpack.c.l.b16 %v2286
      %v2582 = vunpack.c.l.b16 %v2287
      %v2583 = vunpack.c.l.b16 %v2288
      %v2584 = vunpack.c.l.b16 %v2289
      %v2585 = vunpack.c.l.b16 %v2290
      %v2586 = vunpack.c.l.b16 %v2291
      %v2587 = vunpack.c.l.b16 %v2292
      %v2588 = vunpack.c.l.b16 %v2293
      %v2589 = vunpack.c.l.b16 %v2294
      %v2590 = vunpack.c.l.b16 %v2295
      %v2591 = vunpack.c.l.b16 %v2296
      %v2592 = vunpack.c.l.b16 %v2297
      %v2593 = vunpack.c.l.b16 %v2298
      %v2594 = vunpack.c.l.b16 %v2299
      %v2595 = vunpack.c.l.b16 %v2300
      %v2596 = vunpack.c.l.b16 %v2301
      %v2597 = vunpack.c.l.b16 %v2302
      %v2598 = vunpack.c.l.b16 %v2303
      %v2599 = vunpack.c.l.b16 %v2304
      %v2600 = vunpack.c.l.b16 %v2305
      %v2601 = vunpack.c.l.b16 %v2306
      %v2602 = vunpack.c.l.b16 %v2307
      %v2603 = vunpack.c.l.b16 %v2308
      %v2604 = vunpack.c.l.b16 %v2309
      %v2605 = vunpack.c.l.b16 %v2310
      %v2606 = vunpack.c.l.b16 %v2311
      %v2607 = vunpack.c.l.b16 %v2312
      %v2608 = vunpack.c.l.b16 %v2313
      %v2609 = vunpack.c.l.b16 %v2314
      %v2610 = vunpack.c.l.b16 %v2315
      %v2611 = vunpack.c.l.b16 %v2316
      %v2612 = vunpack.c.l.b16 %v2317
      %v2613 = vunpack.c.l.b16 %v2318
      %v2614 = vunpack.c.l.b16 %v2319
      %v2615 = vunpack.c.l.b16 %v2320
      %v2616 = vunpack.c.l.b16 %v2321
      %v2617 = vunpack.c.l.b16 %v2322
      %v2618 = vunpack.c.l.b16 %v2323
      %v2619 = vunpack.c.l.b16 %v2324
      %v2620 = vunpack.c.l.b16 %v2325
      %v2621 = vunpack.c.l.b16 %v2326
      %v2622 = vunpack.c.l.b16 %v2327
      %v2623 = vunpack.c.l.b16 %v2328
      %v2624 = vunpack.c.l.b16 %v2329
      %v2625 = vunpack.c.l.b16 %v2330
      %v2626 = vunpack.c.l.b16 %v2331
      %v2627 = vunpack.c.l.b16 %v2332
      %v2628 = vunpack.c.l.b16 %v2333
      %v2629 = vunpack.c.l.b16 %v2334
      %v2630 = vunpack.c.l.b16 %v2335
      %v2631 = vunpack.c.l.b16 %v2336
      %v2632 = vunpack.c.l.b16 %v2337
      %v2633 = vunpack.c.l.b16 %v2338
      %v2634 = vunpack.c.l.b16 %v2339
      %v2635 = vunpack.c.l.b16 %v2340
      %v2636 = vunpack.c.l.b16 %v2341
      %v2637 = vunpack.c.l.b16 %v2342
      %v2638 = vpack.c.b16 %v2495, %v2494
      %v2639 = vpack.c.b16 %v2497, %v2496
      %v2640 = vpack.c.b16 %v2499, %v2498
      %v2641 = vpack.c.b16 %v2501, %v2500
      %v2642 = vpack.c.b16 %v2503, %v2502
      %v2643 = vpack.c.b16 %v2505, %v2504
      %v2644 = vpack.c.b16 %v2507, %v2506
      %v2645 = vpack.c.b16 %v2509, %v2508
      %v2646 = vpack.c.b16 %v2511, %v2510
      %v2647 = vpack.c.b16 %v2513, %v2512
      %v2648 = vpack.c.b16 %v2515, %v2514
      %v2649 = vpack.c.b16 %v2517, %v2516
      %v2650 = vpack.c.b16 %v2519, %v2518
      %v2651 = vpack.c.b16 %v2521, %v2520
      %v2652 = vpack.c.b16 %v2523, %v2522
      %v2653 = vpack.c.b16 %v2525, %v2524
      %v2654 = vpack.c.b16 %v2527, %v2526
      %v2655 = vpack.c.b16 %v2529, %v2528
      %v2656 = vpack.c.b16 %v2531, %v2530
      %v2657 = vpack.c.b16 %v2533, %v2532
      %v2658 = vpack.c.b16 %v2535, %v2534
      %v2659 = vpack.c.b16 %v2537, %v2536
      %v2660 = vpack.c.b16 %v2539, %v2538
      %v2661 = vpack.c.b16 %v2541, %v2540
      %v2662 = vpack.c.b16 %v2543, %v2542
      %v2663 = vpack.c.b16 %v2545, %v2544
      %v2664 = vpack.c.b16 %v2547, %v2546
      %v2665 = vpack.c.b16 %v2549, %v2548
      %v2666 = vpack.c.b16 %v2551, %v2550
      %v2667 = vpack.c.b16 %v2553, %v2552
      %v2668 = vpack.c.b16 %v2555, %v2554
      %v2669 = vpack.c.b16 %v2557, %v2556
      %v2670 = vpack.c.b16 %v2559, %v2558
      %v2671 = vpack.c.b16 %v2561, %v2560
      %v2672 = vpack.c.b16 %v2563, %v2562
      %v2673 = vpack.c.b16 %v2565, %v2564
      %v2674 = vpack.c.b16 %v2567, %v2566
      %v2675 = vpack.c.b16 %v2569, %v2568
      %v2676 = vpack.c.b16 %v2571, %v2570
      %v2677 = vpack.c.b16 %v2573, %v2572
      %v2678 = vpack.c.b16 %v2575, %v2574
      %v2679 = vpack.c.b16 %v2577, %v2576
      %v2680 = vpack.c.b16 %v2579, %v2578
      %v2681 = vpack.c.b16 %v2581, %v2580
      %v2682 = vpack.c.b16 %v2583, %v2582
      %v2683 = vpack.c.b16 %v2585, %v2584
      %v2684 = vpack.c.b16 %v2587, %v2586
      %v2685 = vpack.c.b16 %v2589, %v2588
      %v2686 = vpack.c.b16 %v2591, %v2590
      %v2687 = vpack.c.b16 %v2593, %v2592
      %v2688 = vpack.c.b16 %v2595, %v2594
      %v2689 = vpack.c.b16 %v2597, %v2596
      %v2690 = vpack.c.b16 %v2599, %v2598
      %v2691 = vpack.c.b16 %v2601, %v2600
      %v2692 = vpack.c.b16 %v2603, %v2602
      %v2693 = vpack.c.b16 %v2605, %v2604
      %v2694 = vpack.c.b16 %v2607, %v2606
      %v2695 = vpack.c.b16 %v2609, %v2608
      %v2696 = vpack.c.b16 %v2611, %v2610
      %v2697 = vpack.c.b16 %v2613, %v2612
      %v2698 = vpack.c.b16 %v2615, %v2614
      %v2699 = vpack.c.b16 %v2617, %v2616
      %v2700 = vpack.c.b16 %v2619, %v2618
      %v2701 = vpack.c.b16 %v2621, %v2620
      %v2702 = vpack.c.b16 %v2623, %v2622
      %v2703 = vpack.c.b16 %v2625, %v2624
      %v2704 = vpack.c.b16 %v2627, %v2626
      %v2705 = vpack.c.b16 %v2629, %v2628
      %v2706 = vpack.c.b16 %v2631, %v2630
      %v2707 = vpack.c.b16 %v2633, %v2632
      %v2708 = vpack.c.b16 %v2635, %v2634
      %v2709 = vpack.c.b16 %v2637, %v2636
      %2782 = vmatprep.subr.bf16.mxu0 0
      %2783 = vmatpush1.bf16.msra.mxu0 %v2638
      %2784 = vmatprep.subr.bf16.mxu0 0
      %2785 = vmatpush1.bf16.msra.mxu0 %v2639
      %2786 = vmatprep.subr.bf16.mxu0 0
      %2787 = vmatpush1.bf16.msra.mxu0 %v2640
      %2788 = vmatprep.subr.bf16.mxu0 0
      %2789 = vmatpush1.bf16.msra.mxu0 %v2641
      %2790 = vmatprep.subr.bf16.mxu0 0
      %2791 = vmatpush1.bf16.msra.mxu0 %v2642
      %2792 = vmatprep.subr.bf16.mxu0 0
      %2793 = vmatpush1.bf16.msra.mxu0 %v2643
      %2794 = vmatprep.subr.bf16.mxu0 0
      %2795 = vmatpush1.bf16.msra.mxu0 %v2644
      %2796 = vmatprep.subr.bf16.mxu0 0
      %2797 = vmatpush1.bf16.msra.mxu0 %v2645
      %2798 = vmatprep.subr.bf16.mxu0 0
      %2799 = vmatpush1.bf16.msra.mxu0 %v2646
      %2800 = vmatprep.subr.bf16.mxu0 0
      %2801 = vmatpush1.bf16.msra.mxu0 %v2647
      %2802 = vmatprep.subr.bf16.mxu0 0
      %2803 = vmatpush1.bf16.msra.mxu0 %v2648
      %2804 = vmatprep.subr.bf16.mxu0 0
      %2805 = vmatpush1.bf16.msra.mxu0 %v2649
      %2806 = vmatprep.subr.bf16.mxu0 0
      %2807 = vmatpush1.bf16.msra.mxu0 %v2650
      %2808 = vmatprep.subr.bf16.mxu0 0
      %2809 = vmatpush1.bf16.msra.mxu0 %v2651
      %2810 = vmatprep.subr.bf16.mxu0 0
      %2811 = vmatpush1.bf16.msra.mxu0 %v2652
      %2812 = vmatprep.subr.bf16.mxu0 0
      %2813 = vmatpush1.bf16.msra.mxu0 %v2653
      %2814 = vmatprep.mubr.bf16.mxu0 %v2020
      %2815 = vmatmul.mubr.bf16.gmra.mrb[0].mxu0 %v1989
      %v2816 = vpop.f32.mrb[0].mxu0
      %v2817 = vadd.f32 %v2348, %v2816
      %v2818 = vpop.f32.mrb[0].mxu0
      %v2819 = vpop.f32.mrb[0].mxu0
      %v2820 = vadd.f32 %v2348, %v2819
      %v2821 = vpop.f32.mrb[0].mxu0
      %2822 = vmatprep.mubr.bf16.mxu0 %v2032
      %2823 = vmatmul.mubr.bf16.gmra.mrb[0].mxu0 %v1990
      %v2824 = vpop.f32.mrb[0].mxu0
      %v2825 = vadd.f32 %v2348, %v2824
      %v2826 = vpop.f32.mrb[0].mxu0
      %v2827 = vpop.f32.mrb[0].mxu0
      %v2828 = vadd.f32 %v2348, %v2827
      %v2829 = vpop.f32.mrb[0].mxu0
      %2830 = vmatprep.mubr.bf16.mxu0 %v2044
      %2831 = vmatmul.mubr.bf16.gmra.mrb[0].mxu0 %v1991
      %v2832 = vpop.f32.mrb[0].mxu0
      %v2833 = vadd.f32 %v2348, %v2832
      %v2834 = vpop.f32.mrb[0].mxu0
      %v2835 = vpop.f32.mrb[0].mxu0
      %v2836 = vadd.f32 %v2348, %v2835
      %v2837 = vpop.f32.mrb[0].mxu0
      %2838 = vmatprep.mubr.bf16.mxu0 %v2056
      %2839 = vmatmul.mubr.bf16.gmra.mrb[0].mxu0 %v1992
      %v2840 = vpop.f32.mrb[0].mxu0
      %v2841 = vadd.f32 %v2348, %v2840
      %v2842 = vpop.f32.mrb[0].mxu0
      %v2843 = vpop.f32.mrb[0].mxu0
      %v2844 = vadd.f32 %v2348, %v2843
      %v2845 = vpop.f32.mrb[0].mxu0
      %2846 = vmatprep.mubr.bf16.mxu0 %v2068
      %2847 = vmatmul.mubr.bf16.gmra.mrb[0].mxu0 %v1993
      %v2848 = vpop.f32.mrb[0].mxu0
      %v2849 = vadd.f32 %v2348, %v2848
      %v2850 = vpop.f32.mrb[0].mxu0
      %v2851 = vpop.f32.mrb[0].mxu0
      %v2852 = vadd.f32 %v2348, %v2851
      %v2853 = vpop.f32.mrb[0].mxu0
      %2854 = vmatprep.mubr.bf16.mxu0 %v2080
      %2855 = vmatmul.mubr.bf16.gmra.mrb[0].mxu0 %v1994
      %v2856 = vpop.f32.mrb[0].mxu0
      %v2857 = vadd.f32 %v2348, %v2856
      %v2858 = vpop.f32.mrb[0].mxu0
      %v2859 = vpop.f32.mrb[0].mxu0
      %v2860 = vadd.f32 %v2348, %v2859
      %v2861 = vpop.f32.mrb[0].mxu0
      %2862 = vmatprep.mubr.bf16.mxu0 %v2092
      %2863 = vmatmul.mubr.bf16.gmra.mrb[0].mxu0 %v1995
      %v2864 = vpop.f32.mrb[0].mxu0
      %v2865 = vadd.f32 %v2348, %v2864
      %v2866 = vpop.f32.mrb[0].mxu0
      %v2867 = vpop.f32.mrb[0].mxu0
      %v2868 = vadd.f32 %v2348, %v2867
      %v2869 = vpop.f32.mrb[0].mxu0
      %2870 = vmatprep.mubr.bf16.mxu0 %v2104
      %2871 = vmatmul.mubr.bf16.gmra.mrb[0].mxu0 %v1996
      %v2872 = vpop.f32.mrb[0].mxu0
      %v2873 = vadd.f32 %v2348, %v2872
      %v2874 = vpop.f32.mrb[0].mxu0
      %v2875 = vpop.f32.mrb[0].mxu0
      %v2876 = vadd.f32 %v2348, %v2875
      %v2877 = vpop.f32.mrb[0].mxu0
      %2878 = vdwg.mxu0
      %2879 = vmatprep.subr.bf16.mxu0 0
      %2880 = vmatpush1.bf16.msra.mxu0 %v2654
      %2881 = vmatprep.subr.bf16.mxu0 0
      %2882 = vmatpush1.bf16.msra.mxu0 %v2655
      %2883 = vmatprep.subr.bf16.mxu0 0
      %2884 = vmatpush1.bf16.msra.mxu0 %v2656
      %2885 = vmatprep.subr.bf16.mxu0 0
      %2886 = vmatpush1.bf16.msra.mxu0 %v2657
      %2887 = vmatprep.subr.bf16.mxu0 0
      %2888 = vmatpush1.bf16.msra.mxu0 %v2658
      %2889 = vmatprep.subr.bf16.mxu0 0
      %2890 = vmatpush1.bf16.msra.mxu0 %v2659
      %2891 = vmatprep.subr.bf16.mxu0 0
      %2892 = vmatpush1.bf16.msra.mxu0 %v2660
      %2893 = vmatprep.subr.bf16.mxu0 0
      %2894 = vmatpush1.bf16.msra.mxu0 %v2661
      %2895 = vmatprep.subr.bf16.mxu0 0
      %2896 = vmatpush1.bf16.msra.mxu0 %v2662
      %2897 = vmatprep.subr.bf16.mxu0 0
      %2898 = vmatpush1.bf16.msra.mxu0 %v2663
      %2899 = vmatprep.subr.bf16.mxu0 0
      %2900 = vmatpush1.bf16.msra.mxu0 %v2664
      %2901 = vmatprep.subr.bf16.mxu0 0
      %2902 = vmatpush1.bf16.msra.mxu0 %v2665
      %2903 = vmatprep.subr.bf16.mxu0 0
      %2904 = vmatpush1.bf16.msra.mxu0 %v2666
      %2905 = vmatprep.subr.bf16.mxu0 0
      %2906 = vmatpush1.bf16.msra.mxu0 %v2667
      %2907 = vmatprep.subr.bf16.mxu0 0
      %2908 = vmatpush1.bf16.msra.mxu0 %v2668
      %2909 = vmatprep.subr.bf16.mxu0 0
      %2910 = vmatpush1.bf16.msra.mxu0 %v2669
      %2911 = vmatprep.mubr.bf16.mxu0 %v1990
      %2912 = vmatmul.mubr.bf16.gmra.mrb[0].mxu0 %v2131
      %v2913 = vpop.f32.mrb[0].mxu0
      %v2914 = vadd.f32 %v2817, %v2913
      %v2915 = vpop.f32.mrb[0].mxu0
      %v2916 = vpop.f32.mrb[0].mxu0
      %v2917 = vadd.f32 %v2820, %v2916
      %v2918 = vpop.f32.mrb[0].mxu0
      %2919 = vmatprep.mubr.bf16.mxu0 %v1991
      %2920 = vmatmul.mubr.bf16.gmra.mrb[0].mxu0 %v2134
      %v2921 = vpop.f32.mrb[0].mxu0
      %v2922 = vadd.f32 %v2825, %v2921
      %v2923 = vpop.f32.mrb[0].mxu0
      %v2924 = vpop.f32.mrb[0].mxu0
      %v2925 = vadd.f32 %v2828, %v2924
      %v2926 = vpop.f32.mrb[0].mxu0
      %2927 = vmatprep.mubr.bf16.mxu0 %v1992
      %2928 = vmatmul.mubr.bf16.gmra.mrb[0].mxu0 %v2137
      %v2929 = vpop.f32.mrb[0].mxu0
      %v2930 = vadd.f32 %v2833, %v2929
      %v2931 = vpop.f32.mrb[0].mxu0
      %v2932 = vpop.f32.mrb[0].mxu0
      %v2933 = vadd.f32 %v2836, %v2932
      %v2934 = vpop.f32.mrb[0].mxu0
      %2935 = vmatprep.mubr.bf16.mxu0 %v1993
      %2936 = vmatmul.mubr.bf16.gmra.mrb[0].mxu0 %v2140
      %v2937 = vpop.f32.mrb[0].mxu0
      %v2938 = vadd.f32 %v2841, %v2937
      %v2939 = vpop.f32.mrb[0].mxu0
      %v2940 = vpop.f32.mrb[0].mxu0
      %v2941 = vadd.f32 %v2844, %v2940
      %v2942 = vpop.f32.mrb[0].mxu0
      %2943 = vmatprep.mubr.bf16.mxu0 %v1994
      %2944 = vmatmul.mubr.bf16.gmra.mrb[0].mxu0 %v2143
      %v2945 = vpop.f32.mrb[0].mxu0
      %v2946 = vadd.f32 %v2849, %v2945
      %v2947 = vpop.f32.mrb[0].mxu0
      %v2948 = vpop.f32.mrb[0].mxu0
      %v2949 = vadd.f32 %v2852, %v2948
      %v2950 = vpop.f32.mrb[0].mxu0
      %2951 = vmatprep.mubr.bf16.mxu0 %v1995
      %2952 = vmatmul.mubr.bf16.gmra.mrb[0].mxu0 %v2146
      %v2953 = vpop.f32.mrb[0].mxu0
      %v2954 = vadd.f32 %v2857, %v2953
      %v2955 = vpop.f32.mrb[0].mxu0
      %v2956 = vpop.f32.mrb[0].mxu0
      %v2957 = vadd.f32 %v2860, %v2956
      %v2958 = vpop.f32.mrb[0].mxu0
      %2959 = vmatprep.mubr.bf16.mxu0 %v1996
      %2960 = vmatmul.mubr.bf16.gmra.mrb[0].mxu0 %v2149
      %v2961 = vpop.f32.mrb[0].mxu0
      %v2962 = vadd.f32 %v2865, %v2961
      %v2963 = vpop.f32.mrb[0].mxu0
      %v2964 = vpop.f32.mrb[0].mxu0
      %v2965 = vadd.f32 %v2868, %v2964
      %v2966 = vpop.f32.mrb[0].mxu0
      %2967 = vmatprep.mubr.bf16.mxu0 %v1997
      %2968 = vmatmul.mubr.bf16.gmra.mrb[0].mxu0 %v2152
      %v2969 = vpop.f32.mrb[0].mxu0
      %v2970 = vadd.f32 %v2873, %v2969
      %v2971 = vpop.f32.mrb[0].mxu0
      %v2972 = vpop.f32.mrb[0].mxu0
      %v2973 = vadd.f32 %v2876, %v2972
      %v2974 = vpop.f32.mrb[0].mxu0
      %2975 = vdwg.mxu0
      %2976 = vmatprep.subr.bf16.mxu0 0
      %2977 = vmatpush1.bf16.msra.mxu0 %v2670
      %2978 = vmatprep.subr.bf16.mxu0 0
      %2979 = vmatpush1.bf16.msra.mxu0 %v2671
      %2980 = vmatprep.subr.bf16.mxu0 0
      %2981 = vmatpush1.bf16.msra.mxu0 %v2672
      %2982 = vmatprep.subr.bf16.mxu0 0
      %2983 = vmatpush1.bf16.msra.mxu0 %v2673
      %2984 = vmatprep.subr.bf16.mxu0 0
      %2985 = vmatpush1.bf16.msra.mxu0 %v2674
      %2986 = vmatprep.subr.bf16.mxu0 0
      %2987 = vmatpush1.bf16.msra.mxu0 %v2675
      %2988 = vmatprep.subr.bf16.mxu0 0
      %2989 = vmatpush1.bf16.msra.mxu0 %v2676
      %2990 = vmatprep.subr.bf16.mxu0 0
      %2991 = vmatpush1.bf16.msra.mxu0 %v2677
      %2992 = vmatprep.subr.bf16.mxu0 0
      %2993 = vmatpush1.bf16.msra.mxu0 %v2678
      %2994 = vmatprep.subr.bf16.mxu0 0
      %2995 = vmatpush1.bf16.msra.mxu0 %v2679
      %2996 = vmatprep.subr.bf16.mxu0 0
      %2997 = vmatpush1.bf16.msra.mxu0 %v2680
      %2998 = vmatprep.subr.bf16.mxu0 0
      %2999 = vmatpush1.bf16.msra.mxu0 %v2681
      %3000 = vmatprep.subr.bf16.mxu0 0
      %3001 = vmatpush1.bf16.msra.mxu0 %v2682
      %3002 = vmatprep.subr.bf16.mxu0 0
      %3003 = vmatpush1.bf16.msra.mxu0 %v2683
      %3004 = vmatprep.subr.bf16.mxu0 0
      %3005 = vmatpush1.bf16.msra.mxu0 %v2684
      %3006 = vmatprep.subr.bf16.mxu0 0
      %3007 = vmatpush1.bf16.msra.mxu0 %v2685
      %3008 = vmatprep.mubr.bf16.mxu0 %v2134
      %3009 = vmatmul.mubr.bf16.gmra.mrb[0].mxu0 %v2032
      %v3010 = vpop.f32.mrb[0].mxu0
      %v3011 = vadd.f32 %v2914, %v3010
      %v3012 = vpop.f32.mrb[0].mxu0
      %v3013 = vpop.f32.mrb[0].mxu0
      %v3014 = vadd.f32 %v2917, %v3013
      %v3015 = vpop.f32.mrb[0].mxu0
      %3016 = vmatprep.mubr.bf16.mxu0 %v2137
      %3017 = vmatmul.mubr.bf16.gmra.mrb[0].mxu0 %v2044
      %v3018 = vpop.f32.mrb[0].mxu0
      %v3019 = vadd.f32 %v2922, %v3018
      %v3020 = vpop.f32.mrb[0].mxu0
      %v3021 = vpop.f32.mrb[0].mxu0
      %v3022 = vadd.f32 %v2925, %v3021
      %v3023 = vpop.f32.mrb[0].mxu0
      %3024 = vmatprep.mubr.bf16.mxu0 %v2140
      %3025 = vmatmul.mubr.bf16.gmra.mrb[0].mxu0 %v2056
      %v3026 = vpop.f32.mrb[0].mxu0
      %v3027 = vadd.f32 %v2930, %v3026
      %v3028 = vpop.f32.mrb[0].mxu0
      %v3029 = vpop.f32.mrb[0].mxu0
      %v3030 = vadd.f32 %v2933, %v3029
      %v3031 = vpop.f32.mrb[0].mxu0
      %3032 = vmatprep.mubr.bf16.mxu0 %v2143
      %3033 = vmatmul.mubr.bf16.gmra.mrb[0].mxu0 %v2068
      %v3034 = vpop.f32.mrb[0].mxu0
      %v3035 = vadd.f32 %v2938, %v3034
      %v3036 = vpop.f32.mrb[0].mxu0
      %v3037 = vpop.f32.mrb[0].mxu0
      %v3038 = vadd.f32 %v2941, %v3037
      %v3039 = vpop.f32.mrb[0].mxu0
      %3040 = vmatprep.mubr.bf16.mxu0 %v2146
      %3041 = vmatmul.mubr.bf16.gmra.mrb[0].mxu0 %v2080
      %v3042 = vpop.f32.mrb[0].mxu0
      %v3043 = vadd.f32 %v2946, %v3042
      %v3044 = vpop.f32.mrb[0].mxu0
      %v3045 = vpop.f32.mrb[0].mxu0
      %v3046 = vadd.f32 %v2949, %v3045
      %v3047 = vpop.f32.mrb[0].mxu0
      %3048 = vmatprep.mubr.bf16.mxu0 %v2149
      %3049 = vmatmul.mubr.bf16.gmra.mrb[0].mxu0 %v2092
      %v3050 = vpop.f32.mrb[0].mxu0
      %v3051 = vadd.f32 %v2954, %v3050
      %v3052 = vpop.f32.mrb[0].mxu0
      %v3053 = vpop.f32.mrb[0].mxu0
      %v3054 = vadd.f32 %v2957, %v3053
      %v3055 = vpop.f32.mrb[0].mxu0
      %3056 = vmatprep.mubr.bf16.mxu0 %v2152
      %3057 = vmatmul.mubr.bf16.gmra.mrb[0].mxu0 %v2104
      %v3058 = vpop.f32.mrb[0].mxu0
      %v3059 = vadd.f32 %v2962, %v3058
      %v3060 = vpop.f32.mrb[0].mxu0
      %v3061 = vpop.f32.mrb[0].mxu0
      %v3062 = vadd.f32 %v2965, %v3061
      %v3063 = vpop.f32.mrb[0].mxu0
      %3064 = vmatprep.mubr.bf16.mxu0 %v2178
      %3065 = vmatmul.mubr.bf16.gmra.mrb[0].mxu0 %v2172
      %v3066 = vpop.f32.mrb[0].mxu0
      %v3067 = vadd.f32 %v2970, %v3066
      %v3068 = vpop.f32.mrb[0].mxu0
      %v3069 = vpop.f32.mrb[0].mxu0
      %v3070 = vadd.f32 %v2973, %v3069
      %v3071 = vpop.f32.mrb[0].mxu0
      %3072 = vdwg.mxu0
      %3073 = vmatprep.subr.bf16.mxu0 0
      %3074 = vmatpush1.bf16.msra.mxu0 %v2686
      %3075 = vmatprep.subr.bf16.mxu0 0
      %3076 = vmatpush1.bf16.msra.mxu0 %v2687
      %3077 = vmatprep.subr.bf16.mxu0 0
      %3078 = vmatpush1.bf16.msra.mxu0 %v2688
      %3079 = vmatprep.subr.bf16.mxu0 0
      %3080 = vmatpush1.bf16.msra.mxu0 %v2689
      %3081 = vmatprep.subr.bf16.mxu0 0
      %3082 = vmatpush1.bf16.msra.mxu0 %v2690
      %3083 = vmatprep.subr.bf16.mxu0 0
      %3084 = vmatpush1.bf16.msra.mxu0 %v2691
      %3085 = vmatprep.subr.bf16.mxu0 0
      %3086 = vmatpush1.bf16.msra.mxu0 %v2692
      %3087 = vmatprep.subr.bf16.mxu0 0
      %3088 = vmatpush1.bf16.msra.mxu0 %v2693
      %3089 = vmatprep.subr.bf16.mxu0 0
      %3090 = vmatpush1.bf16.msra.mxu0 %v2694
      %3091 = vmatprep.subr.bf16.mxu0 0
      %3092 = vmatpush1.bf16.msra.mxu0 %v2695
      %3093 = vmatprep.subr.bf16.mxu0 0
      %3094 = vmatpush1.bf16.msra.mxu0 %v2696
      %3095 = vmatprep.subr.bf16.mxu0 0
      %3096 = vmatpush1.bf16.msra.mxu0 %v2697
      %3097 = vmatprep.subr.bf16.mxu0 0
      %3098 = vmatpush1.bf16.msra.mxu0 %v2698
      %3099 = vmatprep.subr.bf16.mxu0 0
      %3100 = vmatpush1.bf16.msra.mxu0 %v2699
      %3101 = vmatprep.subr.bf16.mxu0 0
      %3102 = vmatpush1.bf16.msra.mxu0 %v2700
      %3103 = vmatprep.subr.bf16.mxu0 0
      %3104 = vmatpush1.bf16.msra.mxu0 %v2701
      %3105 = vmatprep.mubr.bf16.mxu0 %v2044
      %3106 = vmatmul.mubr.bf16.gmra.mrb[0].mxu0 %v1991
      %v3107 = vpop.f32.mrb[0].mxu0
      %v3108 = vadd.f32 %v3011, %v3107
      %v3109 = vpop.f32.mrb[0].mxu0
      %v3110 = vpop.f32.mrb[0].mxu0
      %v3111 = vadd.f32 %v3014, %v3110
      %v3112 = vpop.f32.mrb[0].mxu0
      %3113 = vmatprep.mubr.bf16.mxu0 %v2056
      %3114 = vmatmul.mubr.bf16.gmra.mrb[0].mxu0 %v1992
      %v3115 = vpop.f32.mrb[0].mxu0
      %v3116 = vadd.f32 %v3019, %v3115
      %v3117 = vpop.f32.mrb[0].mxu0
      %v3118 = vpop.f32.mrb[0].mxu0
      %v3119 = vadd.f32 %v3022, %v3118
      %v3120 = vpop.f32.mrb[0].mxu0
      %3121 = vmatprep.mubr.bf16.mxu0 %v2068
      %3122 = vmatmul.mubr.bf16.gmra.mrb[0].mxu0 %v1993
      %v3123 = vpop.f32.mrb[0].mxu0
      %v3124 = vadd.f32 %v3027, %v3123
      %v3125 = vpop.f32.mrb[0].mxu0
      %v3126 = vpop.f32.mrb[0].mxu0
      %v3127 = vadd.f32 %v3030, %v3126
      %v3128 = vpop.f32.mrb[0].mxu0
      %3129 = vmatprep.mubr.bf16.mxu0 %v2080
      %3130 = vmatmul.mubr.bf16.gmra.mrb[0].mxu0 %v1994
      %v3131 = vpop.f32.mrb[0].mxu0
      %v3132 = vadd.f32 %v3035, %v3131
      %v3133 = vpop.f32.mrb[0].mxu0
      %v3134 = vpop.f32.mrb[0].mxu0
      %v3135 = vadd.f32 %v3038, %v3134
      %v3136 = vpop.f32.mrb[0].mxu0
      %3137 = vmatprep.mubr.bf16.mxu0 %v2092
      %3138 = vmatmul.mubr.bf16.gmra.mrb[0].mxu0 %v1995
      %v3139 = vpop.f32.mrb[0].mxu0
      %v3140 = vadd.f32 %v3043, %v3139
      %v3141 = vpop.f32.mrb[0].mxu0
      %v3142 = vpop.f32.mrb[0].mxu0
      %v3143 = vadd.f32 %v3046, %v3142
      %v3144 = vpop.f32.mrb[0].mxu0
      %3145 = vmatprep.mubr.bf16.mxu0 %v2104
      %3146 = vmatmul.mubr.bf16.gmra.mrb[0].mxu0 %v1996
      %v3147 = vpop.f32.mrb[0].mxu0
      %v3148 = vadd.f32 %v3051, %v3147
      %v3149 = vpop.f32.mrb[0].mxu0
      %v3150 = vpop.f32.mrb[0].mxu0
      %v3151 = vadd.f32 %v3054, %v3150
      %v3152 = vpop.f32.mrb[0].mxu0
      %3153 = vmatprep.mubr.bf16.mxu0 %v2172
      %3154 = vmatmul.mubr.bf16.gmra.mrb[0].mxu0 %v1997
      %v3155 = vpop.f32.mrb[0].mxu0
      %v3156 = vadd.f32 %v3059, %v3155
      %v3157 = vpop.f32.mrb[0].mxu0
      %v3158 = vpop.f32.mrb[0].mxu0
      %v3159 = vadd.f32 %v3062, %v3158
      %v3160 = vpop.f32.mrb[0].mxu0
      %3161 = vmatprep.mubr.bf16.mxu0 %v2191
      %3162 = vmatmul.mubr.bf16.gmra.mrb[0].mxu0 %v1998
      %v3163 = vpop.f32.mrb[0].mxu0
      %v3164 = vadd.f32 %v3067, %v3163
      %v3165 = vpop.f32.mrb[0].mxu0
      %v3166 = vpop.f32.mrb[0].mxu0
      %v3167 = vadd.f32 %v3070, %v3166
      %v3168 = vpop.f32.mrb[0].mxu0
      %3169 = vdwg.mxu0
      %3170 = vmatprep.subr.bf16.mxu0 0
      %3171 = vmatpush1.bf16.msra.mxu0 %v2702
      %3172 = vmatprep.subr.bf16.mxu0 0
      %3173 = vmatpush1.bf16.msra.mxu0 %v2703
      %3174 = vmatprep.subr.bf16.mxu0 0
      %3175 = vmatpush1.bf16.msra.mxu0 %v2704
      %3176 = vmatprep.subr.bf16.mxu0 0
      %3177 = vmatpush1.bf16.msra.mxu0 %v2705
      %3178 = vmatprep.subr.bf16.mxu0 0
      %3179 = vmatpush1.bf16.msra.mxu0 %v2706
      %3180 = vmatprep.subr.bf16.mxu0 0
      %3181 = vmatpush1.bf16.msra.mxu0 %v2707
      %3182 = vmatprep.subr.bf16.mxu0 0
      %3183 = vmatpush1.bf16.msra.mxu0 %v2708
      %3184 = vmatprep.subr.bf16.mxu0 0
      %3185 = vmatpush1.bf16.msra.mxu0 %v2709
      %3186 = vmatprep.subr.bf16.mxu0 0
      %3187 = vmatpush1.bf16.msra.mxu0 0
      %3188 = vmatprep.subr.bf16.mxu0 0
      %3189 = vmatpush1.bf16.msra.mxu0 0
      %3190 = vmatprep.subr.bf16.mxu0 0
      %3191 = vmatpush1.bf16.msra.mxu0 0
      %3192 = vmatprep.subr.bf16.mxu0 0
      %3193 = vmatpush1.bf16.msra.mxu0 0
      %3194 = vmatprep.subr.bf16.mxu0 0
      %3195 = vmatpush1.bf16.msra.mxu0 0
      %3196 = vmatprep.subr.bf16.mxu0 0
      %3197 = vmatpush1.bf16.msra.mxu0 0
      %3198 = vmatprep.subr.bf16.mxu0 0
      %3199 = vmatpush1.bf16.msra.mxu0 0
      %3200 = vmatprep.subr.bf16.mxu0 0
      %3201 = vmatpush1.bf16.msra.mxu0 0
      %3202 = vmatprep.mubr.bf16.mxu0 0
      %3203 = vmatmul.mubr.bf16.gmra.mrb[0].mxu0 %v2137
      %v3204 = vpop.f32.mrb[0].mxu0
      %v3205 = vadd.f32 %v3108, %v3204
      %v3206 = vpop.f32.mrb[0].mxu0
      %v3207 = vpop.f32.mrb[0].mxu0
      %v3208 = vadd.f32 %v3111, %v3207
      %v3209 = vpop.f32.mrb[0].mxu0
      %3210 = vmatprep.mubr.bf16.mxu0 0
      %3211 = vmatmul.mubr.bf16.gmra.mrb[0].mxu0 %v2140
      %v3212 = vpop.f32.mrb[0].mxu0
      %v3213 = vadd.f32 %v3116, %v3212
      %v3214 = vpop.f32.mrb[0].mxu0
      %v3215 = vpop.f32.mrb[0].mxu0
      %v3216 = vadd.f32 %v3119, %v3215
      %v3217 = vpop.f32.mrb[0].mxu0
      %3218 = vmatprep.mubr.bf16.mxu0 0
      %3219 = vmatmul.mubr.bf16.gmra.mrb[0].mxu0 %v2143
      %v3220 = vpop.f32.mrb[0].mxu0
      %v3221 = vadd.f32 %v3124, %v3220
      %v3222 = vpop.f32.mrb[0].mxu0
      %v3223 = vpop.f32.mrb[0].mxu0
      %v3224 = vadd.f32 %v3127, %v3223
      %v3225 = vpop.f32.mrb[0].mxu0
      %3226 = vmatprep.mubr.bf16.mxu0 0
      %3227 = vmatmul.mubr.bf16.gmra.mrb[0].mxu0 %v2146
      %v3228 = vpop.f32.mrb[0].mxu0
      %v3229 = vadd.f32 %v3132, %v3228
      %v3230 = vpop.f32.mrb[0].mxu0
      %v3231 = vpop.f32.mrb[0].mxu0
      %v3232 = vadd.f32 %v3135, %v3231
      %v3233 = vpop.f32.mrb[0].mxu0
      %3234 = vmatprep.mubr.bf16.mxu0 0
      %3235 = vmatmul.mubr.bf16.gmra.mrb[0].mxu0 %v2149
      %v3236 = vpop.f32.mrb[0].mxu0
      %v3237 = vadd.f32 %v3140, %v3236
      %v3238 = vpop.f32.mrb[0].mxu0
      %v3239 = vpop.f32.mrb[0].mxu0
      %v3240 = vadd.f32 %v3143, %v3239
      %v3241 = vpop.f32.mrb[0].mxu0
      %3242 = vmatprep.mubr.bf16.mxu0 0
      %3243 = vmatmul.mubr.bf16.gmra.mrb[0].mxu0 %v2152
      %v3244 = vpop.f32.mrb[0].mxu0
      %v3245 = vadd.f32 %v3148, %v3244
      %v3246 = vpop.f32.mrb[0].mxu0
      %v3247 = vpop.f32.mrb[0].mxu0
      %v3248 = vadd.f32 %v3151, %v3247
      %v3249 = vpop.f32.mrb[0].mxu0
      %3250 = vmatprep.mubr.bf16.mxu0 0
      %3251 = vmatmul.mubr.bf16.gmra.mrb[0].mxu0 %v2178
      %v3252 = vpop.f32.mrb[0].mxu0
      %v3253 = vadd.f32 %v3156, %v3252
      %v3254 = vpop.f32.mrb[0].mxu0
      %v3255 = vpop.f32.mrb[0].mxu0
      %v3256 = vadd.f32 %v3159, %v3255
      %v3257 = vpop.f32.mrb[0].mxu0
      %3258 = vmatprep.mubr.bf16.mxu0 0
      %3259 = vmatmul.mubr.bf16.gmra.mrb[0].mxu0 %v2197
      %v3260 = vpop.f32.mrb[0].mxu0
      %v3261 = vadd.f32 %v3164, %v3260
      %v3262 = vpop.f32.mrb[0].mxu0
      %v3263 = vpop.f32.mrb[0].mxu0
      %v3264 = vadd.f32 %v3167, %v3263
      %v3265 = vpop.f32.mrb[0].mxu0
      %3266 = vdwg.mxu0
      %v3267 = vadd.f32 %v3205, %v329
      %v3268 = vadd.f32 %v3208, %v331
      %v3269 = vadd.f32 %v3213, %v334
      %v3270 = vadd.f32 %v3216, %v336
      %v3271 = vadd.f32 %v3221, %v339
      %v3272 = vadd.f32 %v3224, %v341
      %v3273 = vadd.f32 %v3229, %v344
      %v3274 = vadd.f32 %v3232, %v346
      %v3275 = vadd.f32 %v3237, %v349
      %v3276 = vadd.f32 %v3240, %v351
      %v3277 = vadd.f32 %v3245, %v354
      %v3278 = vadd.f32 %v3248, %v356
      %v3279 = vadd.f32 %v3253, %v359
      %v3280 = vadd.f32 %v3256, %v361
      %v3281 = vadd.f32 %v3261, %v364
      %v3282 = vadd.f32 %v3264, %v366
      %3283 = vst [vmem:[%s262] sm:$0xff] %v3267
      %3284 = vst [vmem:[%s262 + $0x8] sm:$0xff] %v3268
      %3285 = vst [vmem:[%s262 + $0x10] sm:$0xff] %v3269
      %3286 = vst [vmem:[%s262 + $0x18] sm:$0xff] %v3270
      %3287 = vst [vmem:[%s262 + $0x20] sm:$0xff] %v3271
      %3288 = vst [vmem:[%s262 + $0x28] sm:$0xff] %v3272
      %3289 = vst [vmem:[%s262 + $0x30] sm:$0xff] %v3273
      %3290 = vst [vmem:[%s262 + $0x38] sm:$0xff] %v3274
      %3291 = vst [vmem:[%s262 + $0x40] sm:$0xff] %v3275
      %3292 = vst [vmem:[%s262 + $0x48] sm:$0xff] %v3276
      %3293 = vst [vmem:[%s262 + $0x50] sm:$0xff] %v3277
      %3294 = vst [vmem:[%s262 + $0x58] sm:$0xff] %v3278
      %3295 = vst [vmem:[%s262 + $0x60] sm:$0xff] %v3279
      %3296 = vst [vmem:[%s262 + $0x68] sm:$0xff] %v3280
      %3297 = vst [vmem:[%s262 + $0x70] sm:$0xff] %v3281
      %3298 = vst [vmem:[%s262 + $0x78] sm:$0xff] %v3282
      %s3299 = smul.u32 8, %s21
      %p3300 = scmp.lt.s32.totalorder %s20, 1
      %s3301 = scalar_select %p3300, %s20, 1
      %p3302 = scmp.lt.s32.totalorder %s3299, 15
      %s3303 = scalar_select %p3302, %s3299, 15
      %s3304 = smul.addr %s3303, 2
      %s3305 = smul.addr %s3301, 32
      %s3306 = sadd.s32 %s3304, %s3305
      %s3307 = smul.addr %s3306, 8
      %s3308 = scalar_lea.vmem %s5, %s3307
      // Predicated region
      $region41: #{resblock_forward.1} parent=39 // pred_check
        %p3309 = pneg %p160
      $region42: #{resblock_forward.1} parent=39 // pred_check_branch
        %3311 = sbr.rel (%p3309) target = $region44
      $region43: #{resblock_forward.1} parent=39 // pred_region
        %s3312 = smul.u32 8, %s21
      $region44: #{resblock_forward.1} parent=39 // pred_fallthru
        _
    $region40: #{resblock_forward.1} parent=5 // pred_fallthru
      _
    %p3313 = scmp.le.s32.totalorder 2, %s11
    // Predicated region
    $region45: #{resblock_forward.1} parent=5 // pred_check
      %p3314 = pneg %p3313
    $region46: #{resblock_forward.1} parent=5 // pred_check_branch
      %3316 = sbr.rel (%p3314) target = $region48
    $region47: #{resblock_forward.1} parent=5 // pred_region
      %s3317 = ssub.s32 %s11, 2
      // Predicated region
      $region49: #{resblock_forward.1} parent=47 // pred_check
        %p3318 = pneg %p166
      $region50: #{resblock_forward.1} parent=47 // pred_check_branch
        %3320 = sbr.rel (%p3318) target = $region52
      $region51: #{resblock_forward.1} parent=47 // pred_region
        %s3321 = smul.u32 8, %s23
        %p3322 = scmp.lt.s32.totalorder %s22, 1
        %s3323 = scalar_select %p3322, %s22, 1
        %p3324 = scmp.lt.s32.totalorder %s3321, 15
        %s3325 = scalar_select %p3324, %s3321, 15
        %s3326 = smul.addr %s3325, 2
        %s3327 = smul.addr %s3323, 32
        %s3328 = sadd.s32 %s3326, %s3327
        %s3329 = smul.addr %s3328, 8
        %s3330 = scalar_lea.vmem %s5, %s3329
      $region52: #{resblock_forward.1} parent=47 // pred_fallthru
        _
    $region48: #{resblock_forward.1} parent=5 // pred_fallthru
      _
  $region6: #{resblock_forward.1} parent=0 // loop_footer
    %s15 = sadd.s32 1, %s11
  $region7: #{resblock_forward.1} parent=0 // loop_footer_branch
    %10 = sbr.rel target = $region3
  $region8: #{resblock_forward.1} parent=0 // loop_exit
    _

</llo_original>
